<compile_context>
chip_gen: v6e
topology: v6e:2x2x1
jax: 0.10.0
libtpu: 0.0.40
codegen_flags: <defaults>
</compile_context>

<pallas_src>
import functools
import math

import numpy as np
import jax
import jax.numpy as jnp
from jax import lax
from jax.experimental import pallas as pl
from jax.experimental.pallas import tpu as pltpu


# ------------------------------ fused Pallas kernel ------------------------------

def _segmenter_fused_kernel(
    # inputs (per grid step = one batch element; weights are whole-array blocks)
    patches_ref,                 # (T_pad, C*p*p) f32 (row0 + pad rows are zero)
    patch_w_ref, patch_b_ref,    # (C*p*p, D) bf16, (1, D) f32
    cls_pos_ref,                 # (T_pad, D) f32  (row0=cls+pos0-patch_b, pad=-patch_b)
    ln1_g_ref, ln1_b_ref,        # (1, D) f32
    wqkv_ref, bqkv_ref,          # (D, 3D) bf16, (1, 3D) f32
    wo_ref, bo_ref,              # (D, D) bf16, (1, D) f32
    ln2_g_ref, ln2_b_ref,        # (1, D) f32
    w1_ref, b1_ref,              # (D, HID) bf16, (1, HID) f32
    w2_ref, b2_ref,              # (HID, D) bf16, (1, D) f32
    lnf_g_ref, lnf_b_ref,        # (1, D) f32
    head_w_ref, head_b_ref,      # (NC, D) bf16, (NC, 1) f32
    mt_ref,                      # (T_pad, H*W) bf16 : padded kron(wy,wx)^T (cls/pad rows = 0)
    # outputs
    logits_ref, probs_ref,       # (NC, H*W) f32 (lane-dense, H*W multiple of 128)
    *, tokens, heads, head_dim, ln_eps):
  Tp = cls_pos_ref.shape[0]
  D = heads * head_dim
  scale = 1.0 / math.sqrt(head_dim)
  bf16 = jnp.bfloat16

  def ln(v, g_ref, b_ref):
    mu = jnp.mean(v, axis=-1, keepdims=True)
    var = jnp.mean((v - mu) * (v - mu), axis=-1, keepdims=True)
    return (v - mu) * lax.rsqrt(var + ln_eps) * g_ref[...] + b_ref[...]

  def mm(a, w):
    return jnp.dot(a.astype(bf16), w.astype(bf16),
                   preferred_element_type=jnp.float32)

  # ---- patch embedding + [cls] + positional embedding: one matmul + one add ----
  x = mm(patches_ref[...], patch_w_ref[...]) + patch_b_ref[...] + cls_pos_ref[...]

  # ---- pre-LN multi-head self attention (fused QKV, fused output projection) ----
  hx = ln(x, ln1_g_ref, ln1_b_ref)
  qkv = mm(hx, wqkv_ref[...]) + bqkv_ref[...]                      # (Tp, 3D)
  kmask = lax.broadcasted_iota(jnp.int32, (Tp, Tp), 1) < tokens    # mask padded keys
  heads_out = []
  for h in range(heads):
    q = qkv[:, h * head_dim:(h + 1) * head_dim]
    k = qkv[:, D + h * head_dim:D + (h + 1) * head_dim]
    v = qkv[:, 2 * D + h * head_dim:2 * D + (h + 1) * head_dim]
    s = mm(q, k.T) * scale                                         # (Tp, Tp)
    s = jnp.where(kmask, s, -1e30)
    m = jnp.max(s, axis=-1, keepdims=True)
    e = jnp.exp(s - m)
    p = e * pl.reciprocal(jnp.sum(e, axis=-1, keepdims=True), approx=True)
    heads_out.append(mm(p, v))                                     # (Tp, dh)
  o_cat = jnp.concatenate(heads_out, axis=-1)                      # (Tp, D)
  x = x + mm(o_cat, wo_ref[...]) + bo_ref[...]

  # ---- pre-LN MLP (tanh-approx GELU; synthetic block) ----
  h2 = ln(x, ln2_g_ref, ln2_b_ref)
  m1 = mm(h2, w1_ref[...]) + b1_ref[...]
  c_gelu = math.sqrt(2.0 / math.pi)
  m1 = 0.5 * m1 * (1.0 + jnp.tanh(c_gelu * (m1 + 0.044715 * m1 * m1 * m1)))
  x = x + mm(m1, w2_ref[...]) + b2_ref[...]

  xf = ln(x, lnf_g_ref, lnf_b_ref)                                 # (Tp, D)

  # ---- linear head + fused bilinear upsample + sigmoid ----
  # cls token / padded rows are dropped by the zero rows of mt_ref (no slicing).
  tl = mm(head_w_ref[...], xf.T)                                   # (NC, Tp)
  lg = mm(tl, mt_ref[...]) + head_b_ref[...]                       # (NC, H*W)
  logits_ref[...] = lg
  probs_ref[...] = jnp.minimum(
      pl.reciprocal(1.0 + jnp.exp(-lg), approx=True), 1.0)


# ------------------------------- glue / model -------------------------------

@functools.lru_cache(maxsize=None)
def _bilinear_matrix_np(out_h, out_w, in_h, in_w, pad_rows):
  """Padded M^T with M[(y*W+x),(i*gw+j)] = wy[y,i]*wx[x,j]; matches
  F.interpolate(mode='bilinear', align_corners=False). Row 0 (cls slot) and
  rows >= 1+in_h*in_w (token padding) are zero."""
  def axis_w(out_size, in_size):
    s = in_size / out_size
    w = np.zeros((out_size, in_size), np.float32)
    for i in range(out_size):
      src = max((i + 0.5) * s - 0.5, 0.0)
      i0 = min(int(np.floor(src)), in_size - 1)
      i1 = min(i0 + 1, in_size - 1)
      lam = src - i0
      w[i, i0] += 1.0 - lam
      w[i, i1] += lam
    return w
  wy = axis_w(out_h, in_h)
  wx = axis_w(out_w, in_w)
  m = np.kron(wy, wx).T                         # (in_h*in_w, out_h*out_w)
  mp = np.zeros((pad_rows, out_h * out_w), np.float32)
  mp[1:1 + in_h * in_w, :] = m
  return mp


def init_params(key, in_chans, patch, dim, heads, mlp_ratio, num_tokens, num_classes):
  hid = dim * mlp_ratio
  bf = jnp.bfloat16

  def nrm(k, shape, std=0.02, dtype=jnp.float32):
    return (jax.random.normal(k, shape, jnp.float32) * std).astype(dtype)

  ks = jax.random.split(key, 10)
  p = {
      "cls": nrm(ks[0], (1, dim)),
      "pos": nrm(ks[1], (num_tokens, dim)),
      "patch_w": nrm(ks[2], (patch * patch * in_chans, dim), dtype=bf),
      "patch_b": jnp.zeros((1, dim), jnp.float32),
      "ln1_g": jnp.ones((1, dim), jnp.float32),
      "ln1_b": jnp.zeros((1, dim), jnp.float32),
      # fused QKV: lanes ordered [q_h0..q_h{H-1} | k_h0.. | v_h0..]
      "wqkv": nrm(ks[3], (dim, 3 * dim), dtype=bf),
      "bqkv": jnp.zeros((1, 3 * dim), jnp.float32),
      # fused output projection (heads*dh, D)
      "wo": nrm(ks[4], (dim, dim), dtype=bf),
      "bo": jnp.zeros((1, dim), jnp.float32),
      "ln2_g": jnp.ones((1, dim), jnp.float32),
      "ln2_b": jnp.zeros((1, dim), jnp.float32),
      "mlp_w1": nrm(ks[5], (dim, hid), dtype=bf),
      "mlp_b1": jnp.zeros((1, hid), jnp.float32),
      "mlp_w2": nrm(ks[6], (hid, dim), dtype=bf),
      "mlp_b2": jnp.zeros((1, dim), jnp.float32),
      "lnf_g": jnp.ones((1, dim), jnp.float32),
      "lnf_b": jnp.zeros((1, dim), jnp.float32),
      "head_w": nrm(ks[7], (num_classes, dim), dtype=bf),   # (out, in) like nn.Linear
      "head_b": jnp.zeros((num_classes, 1), jnp.float32),
  }
  return p


def segmenter_forward(im_nchw, p, *, patch, dim, heads, num_classes, image_size):
  """Mirrors Segmenter.forward: transformer -> drop cls -> mlp head ->
  bilinear interpolate -> sigmoid."""
  H, W = image_size
  B, C, Hi, Wi = im_nchw.shape
  gh, gw = Hi // patch, Wi // patch
  N = gh * gw
  T = N + 1
  Tp = ((T + 7) // 8) * 8          # token axis padded to a sublane multiple
  Cpp = C * patch * patch
  HW = H * W
  hid = p["mlp_w1"].shape[1]

  # Patch extraction (pure reshape/transpose) + padding stay in XLA; everything
  # else runs inside the single fused Pallas kernel.
  patches = im_nchw.reshape(B, C, gh, patch, gw, patch)
  patches = jnp.transpose(patches, (0, 2, 4, 1, 3, 5)).reshape(B, N, Cpp)
  patches_pad = jnp.zeros((B, Tp, Cpp), jnp.float32).at[:, 1:1 + N, :].set(patches)

  # cls/pos slab so the kernel does a single vector add; patch_b is subtracted
  # from the cls/pad rows so adding it uniformly inside the kernel stays exact.
  cls_pos = jnp.zeros((Tp, dim), jnp.float32)
  cls_pos = cls_pos.at[0:1, :].set(p["cls"] + p["pos"][0:1, :] - p["patch_b"])
  cls_pos = cls_pos.at[1:T, :].set(p["pos"][1:T, :])
  cls_pos = cls_pos.at[T:Tp, :].set(-p["patch_b"])

  mt = jnp.asarray(_bilinear_matrix_np(H, W, gh, gw, Tp), dtype=jnp.bfloat16)

  kernel = functools.partial(
      _segmenter_fused_kernel, tokens=T, heads=heads, head_dim=dim // heads,
      ln_eps=1e-5)

  def full2d(shape):
    return pl.BlockSpec(shape, lambda b: (0, 0))

  out_spec = pl.BlockSpec((None, num_classes, HW), lambda b: (b, 0, 0))

  logits3, probs3 = pl.pallas_call(
      kernel,
      grid=(B,),
      in_specs=[
          pl.BlockSpec((None, Tp, Cpp), lambda b: (b, 0, 0)),   # patches (per batch)
          full2d((Cpp, dim)), full2d((1, dim)),                 # patch_w, patch_b
          full2d((Tp, dim)),                                    # cls_pos
          full2d((1, dim)), full2d((1, dim)),                   # ln1
          full2d((dim, 3 * dim)), full2d((1, 3 * dim)),         # wqkv, bqkv
          full2d((dim, dim)), full2d((1, dim)),                 # wo, bo
          full2d((1, dim)), full2d((1, dim)),                   # ln2
          full2d((dim, hid)), full2d((1, hid)),                 # mlp w1, b1
          full2d((hid, dim)), full2d((1, dim)),                 # mlp w2, b2
          full2d((1, dim)), full2d((1, dim)),                   # lnf
          full2d((num_classes, dim)), full2d((num_classes, 1)),  # head
          full2d((Tp, HW)),                                     # bilinear matrix
      ],
      out_specs=(out_spec, out_spec),
      out_shape=(jax.ShapeDtypeStruct((B, num_classes, HW), jnp.float32),
                 jax.ShapeDtypeStruct((B, num_classes, HW), jnp.float32)),
      compiler_params=pltpu.CompilerParams(
          dimension_semantics=("parallel",)),
  )(patches_pad, p["patch_w"], p["patch_b"], cls_pos,
    p["ln1_g"], p["ln1_b"], p["wqkv"], p["bqkv"], p["wo"], p["bo"],
    p["ln2_g"], p["ln2_b"], p["mlp_w1"], p["mlp_b1"], p["mlp_w2"], p["mlp_b2"],
    p["lnf_g"], p["lnf_b"], p["head_w"], p["head_b"], mt)

  logits = logits3.reshape(B, num_classes, H, W)
  probs = probs3.reshape(B, num_classes, H, W)
  return logits, probs


if __name__ == "__main__":
  B, C, HI, WI = 2, 3, 16, 16
  PATCH, DIM, HEADS, NC = 4, 32, 4, 1
  IMAGE_SIZE = (16, 16)

  key = jax.random.PRNGKey(0)
  kp, kx = jax.random.split(key)
  gh, gw = HI // PATCH, WI // PATCH
  params = init_params(kp, C, PATCH, DIM, HEADS, 4, gh * gw + 1, NC)
  im = jax.random.normal(kx, (B, C, HI, WI), jnp.float32)

  fwd = jax.jit(functools.partial(
      segmenter_forward, patch=PATCH, dim=DIM, heads=HEADS,
      num_classes=NC, image_size=IMAGE_SIZE))
  logits, probs = fwd(im, params)
  jax.block_until_ready((logits, probs))

  assert logits.shape == (B, NC, IMAGE_SIZE[0], IMAGE_SIZE[1])
  assert probs.shape == (B, NC, IMAGE_SIZE[0], IMAGE_SIZE[1])
  assert bool(jnp.all(jnp.isfinite(logits)))
  assert bool(jnp.all((probs >= 0.0) & (probs <= 1.0)))
  print("KERNEL_OK")
</pallas_src>

<mosaic_0001>
module attributes {stable_mosaic.version = 11 : i64} {
  func.func @_segmenter_fused_kernel(%arg0: i32, %arg1: memref<1x24x48xf32, #tpu.memory_space<vmem>>, %arg2: memref<48x32xbf16, #tpu.memory_space<vmem>>, %arg3: memref<1x32xf32, #tpu.memory_space<vmem>>, %arg4: memref<24x32xf32, #tpu.memory_space<vmem>>, %arg5: memref<1x32xf32, #tpu.memory_space<vmem>>, %arg6: memref<1x32xf32, #tpu.memory_space<vmem>>, %arg7: memref<32x96xbf16, #tpu.memory_space<vmem>>, %arg8: memref<1x96xf32, #tpu.memory_space<vmem>>, %arg9: memref<32x32xbf16, #tpu.memory_space<vmem>>, %arg10: memref<1x32xf32, #tpu.memory_space<vmem>>, %arg11: memref<1x32xf32, #tpu.memory_space<vmem>>, %arg12: memref<1x32xf32, #tpu.memory_space<vmem>>, %arg13: memref<32x128xbf16, #tpu.memory_space<vmem>>, %arg14: memref<1x128xf32, #tpu.memory_space<vmem>>, %arg15: memref<128x32xbf16, #tpu.memory_space<vmem>>, %arg16: memref<1x32xf32, #tpu.memory_space<vmem>>, %arg17: memref<1x32xf32, #tpu.memory_space<vmem>>, %arg18: memref<1x32xf32, #tpu.memory_space<vmem>>, %arg19: memref<1x32xbf16, #tpu.memory_space<vmem>>, %arg20: memref<1x1xf32, #tpu.memory_space<vmem>>, %arg21: memref<24x256xbf16, #tpu.memory_space<vmem>>, %arg22: memref<1x1x256xf32, #tpu.memory_space<vmem>>, %arg23: memref<1x1x256xf32, #tpu.memory_space<vmem>>) attributes {dimension_semantics = [#tpu.dimension_semantics<parallel>], iteration_bounds = array<i64: 2>, scalar_prefetch = 0 : i64, scratch_operands = 0 : i64, tpu.core_type = #tpu.core_type<tc>, window_params = [{transform_indices = @transform_0, window_bounds = array<i64: 1, 24, 48>}, {pipeline_mode = #tpu.pipeline_mode<synchronous>, transform_indices = @transform_1, window_bounds = array<i64: 48, 32>}, {pipeline_mode = #tpu.pipeline_mode<synchronous>, transform_indices = @transform_2, window_bounds = array<i64: 1, 32>}, {pipeline_mode = #tpu.pipeline_mode<synchronous>, transform_indices = @transform_3, window_bounds = array<i64: 24, 32>}, {pipeline_mode = #tpu.pipeline_mode<synchronous>, transform_indices = @transform_4, window_bounds = array<i64: 1, 32>}, {pipeline_mode = #tpu.pipeline_mode<synchronous>, transform_indices = @transform_5, window_bounds = array<i64: 1, 32>}, {pipeline_mode = #tpu.pipeline_mode<synchronous>, transform_indices = @transform_6, window_bounds = array<i64: 32, 96>}, {pipeline_mode = #tpu.pipeline_mode<synchronous>, transform_indices = @transform_7, window_bounds = array<i64: 1, 96>}, {pipeline_mode = #tpu.pipeline_mode<synchronous>, transform_indices = @transform_8, window_bounds = array<i64: 32, 32>}, {pipeline_mode = #tpu.pipeline_mode<synchronous>, transform_indices = @transform_9, window_bounds = array<i64: 1, 32>}, {pipeline_mode = #tpu.pipeline_mode<synchronous>, transform_indices = @transform_10, window_bounds = array<i64: 1, 32>}, {pipeline_mode = #tpu.pipeline_mode<synchronous>, transform_indices = @transform_11, window_bounds = array<i64: 1, 32>}, {pipeline_mode = #tpu.pipeline_mode<synchronous>, transform_indices = @transform_12, window_bounds = array<i64: 32, 128>}, {pipeline_mode = #tpu.pipeline_mode<synchronous>, transform_indices = @transform_13, window_bounds = array<i64: 1, 128>}, {pipeline_mode = #tpu.pipeline_mode<synchronous>, transform_indices = @transform_14, window_bounds = array<i64: 128, 32>}, {pipeline_mode = #tpu.pipeline_mode<synchronous>, transform_indices = @transform_15, window_bounds = array<i64: 1, 32>}, {pipeline_mode = #tpu.pipeline_mode<synchronous>, transform_indices = @transform_16, window_bounds = array<i64: 1, 32>}, {pipeline_mode = #tpu.pipeline_mode<synchronous>, transform_indices = @transform_17, window_bounds = array<i64: 1, 32>}, {pipeline_mode = #tpu.pipeline_mode<synchronous>, transform_indices = @transform_18, window_bounds = array<i64: 1, 32>}, {pipeline_mode = #tpu.pipeline_mode<synchronous>, transform_indices = @transform_19, window_bounds = array<i64: 1, 1>}, {pipeline_mode = #tpu.pipeline_mode<synchronous>, transform_indices = @transform_20, window_bounds = array<i64: 24, 256>}, {transform_indices = @transform_21, window_bounds = array<i64: 1, 1, 256>}, {transform_indices = @transform_22, window_bounds = array<i64: 1, 1, 256>}]} {
    %c0 = arith.constant 0 : index
    %c0_0 = arith.constant 0 : index
    %c0_1 = arith.constant 0 : index
    %0 = vector.load %arg1[%c0, %c0_0, %c0_1] : memref<1x24x48xf32, #tpu.memory_space<vmem>>, vector<1x24x48xf32>
    %1 = vector.shape_cast %0 : vector<1x24x48xf32> to vector<24x48xf32>
    %c0_2 = arith.constant 0 : index
    %c0_3 = arith.constant 0 : index
    %2 = vector.load %arg2[%c0_2, %c0_3] : memref<48x32xbf16, #tpu.memory_space<vmem>>, vector<48x32xbf16>
    %3 = arith.truncf %1 : vector<24x48xf32> to vector<24x48xbf16>
    %cst = arith.constant dense<0.000000e+00> : vector<24x32xf32>
    %4 = tpu.matmul %3, %2, %cst {dimension_numbers = #tpu.dot_dimension_numbers<[1], [0], [0], [1], [0, 0, 1, 1], [], []>} : vector<24x48xbf16>, vector<48x32xbf16>, vector<24x32xf32> -> vector<24x32xf32>
    %c0_4 = arith.constant 0 : index
    %c0_5 = arith.constant 0 : index
    %5 = vector.load %arg3[%c0_4, %c0_5] : memref<1x32xf32, #tpu.memory_space<vmem>>, vector<1x32xf32>
    %6 = vector.broadcast %5 : vector<1x32xf32> to vector<24x32xf32>
    %7 = arith.addf %4, %6 : vector<24x32xf32>
    %c0_6 = arith.constant 0 : index
    %c0_7 = arith.constant 0 : index
    %8 = vector.load %arg4[%c0_6, %c0_7] : memref<24x32xf32, #tpu.memory_space<vmem>>, vector<24x32xf32>
    %9 = arith.addf %7, %8 : vector<24x32xf32>
    %cst_8 = arith.constant dense<0.000000e+00> : vector<24xf32>
    %10 = vector.multi_reduction <add>, %9, %cst_8 [1] : vector<24x32xf32> to vector<24xf32>
    %11 = vector.shape_cast %10 : vector<24xf32> to vector<24x1xf32>
    %cst_9 = arith.constant 3.200000e+01 : f32
    %12 = vector.broadcast %cst_9 : f32 to vector<24x1xf32>
    %13 = arith.divf %11, %12 : vector<24x1xf32>
    %14 = vector.broadcast %13 : vector<24x1xf32> to vector<24x32xf32>
    %15 = arith.subf %9, %14 : vector<24x32xf32>
    %16 = vector.broadcast %13 : vector<24x1xf32> to vector<24x32xf32>
    %17 = arith.subf %9, %16 : vector<24x32xf32>
    %18 = arith.mulf %15, %17 : vector<24x32xf32>
    %cst_10 = arith.constant dense<0.000000e+00> : vector<24xf32>
    %19 = vector.multi_reduction <add>, %18, %cst_10 [1] : vector<24x32xf32> to vector<24xf32>
    %20 = vector.shape_cast %19 : vector<24xf32> to vector<24x1xf32>
    %cst_11 = arith.constant 3.200000e+01 : f32
    %21 = vector.broadcast %cst_11 : f32 to vector<24x1xf32>
    %22 = arith.divf %20, %21 : vector<24x1xf32>
    %23 = vector.broadcast %13 : vector<24x1xf32> to vector<24x32xf32>
    %24 = arith.subf %9, %23 : vector<24x32xf32>
    %cst_12 = arith.constant 9.99999974E-6 : f32
    %25 = vector.broadcast %cst_12 : f32 to vector<24x1xf32>
    %26 = arith.addf %22, %25 : vector<24x1xf32>
    %27 = math.rsqrt %26 : vector<24x1xf32>
    %28 = vector.broadcast %27 : vector<24x1xf32> to vector<24x32xf32>
    %29 = arith.mulf %24, %28 : vector<24x32xf32>
    %c0_13 = arith.constant 0 : index
    %c0_14 = arith.constant 0 : index
    %30 = vector.load %arg5[%c0_13, %c0_14] : memref<1x32xf32, #tpu.memory_space<vmem>>, vector<1x32xf32>
    %31 = vector.broadcast %30 : vector<1x32xf32> to vector<24x32xf32>
    %32 = arith.mulf %29, %31 : vector<24x32xf32>
    %c0_15 = arith.constant 0 : index
    %c0_16 = arith.constant 0 : index
    %33 = vector.load %arg6[%c0_15, %c0_16] : memref<1x32xf32, #tpu.memory_space<vmem>>, vector<1x32xf32>
    %34 = vector.broadcast %33 : vector<1x32xf32> to vector<24x32xf32>
    %35 = arith.addf %32, %34 : vector<24x32xf32>
    %c0_17 = arith.constant 0 : index
    %c0_18 = arith.constant 0 : index
    %36 = vector.load %arg7[%c0_17, %c0_18] : memref<32x96xbf16, #tpu.memory_space<vmem>>, vector<32x96xbf16>
    %37 = arith.truncf %35 : vector<24x32xf32> to vector<24x32xbf16>
    %cst_19 = arith.constant dense<0.000000e+00> : vector<24x96xf32>
    %38 = tpu.matmul %37, %36, %cst_19 {dimension_numbers = #tpu.dot_dimension_numbers<[1], [0], [0], [1], [0, 0, 1, 1], [], []>} : vector<24x32xbf16>, vector<32x96xbf16>, vector<24x96xf32> -> vector<24x96xf32>
    %c0_20 = arith.constant 0 : index
    %c0_21 = arith.constant 0 : index
    %39 = vector.load %arg8[%c0_20, %c0_21] : memref<1x96xf32, #tpu.memory_space<vmem>>, vector<1x96xf32>
    %40 = vector.broadcast %39 : vector<1x96xf32> to vector<24x96xf32>
    %41 = arith.addf %38, %40 : vector<24x96xf32>
    %42 = tpu.iota {dimensions = array<i32: 1>} : vector<24x24xi32>
    %c17_i32 = arith.constant 17 : i32
    %43 = vector.broadcast %c17_i32 : i32 to vector<24x24xi32>
    %44 = arith.cmpi slt, %42, %43 : vector<24x24xi32>
    %45 = vector.extract_strided_slice %41 {offsets = [0, 0], sizes = [24, 8], strides = [1, 1]} : vector<24x96xf32> to vector<24x8xf32>
    %46 = vector.extract_strided_slice %41 {offsets = [0, 32], sizes = [24, 8], strides = [1, 1]} : vector<24x96xf32> to vector<24x8xf32>
    %47 = vector.extract_strided_slice %41 {offsets = [0, 64], sizes = [24, 8], strides = [1, 1]} : vector<24x96xf32> to vector<24x8xf32>
    %48 = tpu.transpose %46, [1, 0] : vector<24x8xf32> -> vector<8x24xf32>
    %49 = arith.truncf %45 : vector<24x8xf32> to vector<24x8xbf16>
    %50 = arith.truncf %48 : vector<8x24xf32> to vector<8x24xbf16>
    %cst_22 = arith.constant dense<0.000000e+00> : vector<24x24xf32>
    %51 = tpu.matmul %49, %50, %cst_22 {dimension_numbers = #tpu.dot_dimension_numbers<[1], [0], [0], [1], [0, 0, 1, 1], [], []>} : vector<24x8xbf16>, vector<8x24xbf16>, vector<24x24xf32> -> vector<24x24xf32>
    %cst_23 = arith.constant 0.353553385 : f32
    %52 = vector.broadcast %cst_23 : f32 to vector<24x24xf32>
    %53 = arith.mulf %51, %52 : vector<24x24xf32>
    %cst_24 = arith.constant -1.000000e+30 : f32
    %54 = vector.broadcast %cst_24 : f32 to vector<24x24xf32>
    %55 = arith.select %44, %53, %54 : vector<24x24xi1>, vector<24x24xf32>
    %cst_25 = arith.constant dense<0xFF800000> : vector<24xf32>
    %56 = vector.multi_reduction <maximumf>, %55, %cst_25 [1] : vector<24x24xf32> to vector<24xf32>
    %57 = vector.shape_cast %56 : vector<24xf32> to vector<24x1xf32>
    %58 = vector.broadcast %57 : vector<24x1xf32> to vector<24x24xf32>
    %59 = arith.subf %55, %58 : vector<24x24xf32>
    %60 = math.exp %59 : vector<24x24xf32>
    %cst_26 = arith.constant dense<0.000000e+00> : vector<24xf32>
    %61 = vector.multi_reduction <add>, %60, %cst_26 [1] : vector<24x24xf32> to vector<24xf32>
    %62 = vector.shape_cast %61 : vector<24xf32> to vector<24x1xf32>
    %63 = tpu.reciprocal %62 {approx = true} : vector<24x1xf32> -> vector<24x1xf32>
    %64 = vector.broadcast %63 : vector<24x1xf32> to vector<24x24xf32>
    %65 = arith.mulf %60, %64 : vector<24x24xf32>
    %66 = arith.truncf %65 : vector<24x24xf32> to vector<24x24xbf16>
    %67 = arith.truncf %47 : vector<24x8xf32> to vector<24x8xbf16>
    %cst_27 = arith.constant dense<0.000000e+00> : vector<24x8xf32>
    %68 = tpu.matmul %66, %67, %cst_27 {dimension_numbers = #tpu.dot_dimension_numbers<[1], [0], [0], [1], [0, 0, 1, 1], [], []>} : vector<24x24xbf16>, vector<24x8xbf16>, vector<24x8xf32> -> vector<24x8xf32>
    %69 = vector.extract_strided_slice %41 {offsets = [0, 8], sizes = [24, 8], strides = [1, 1]} : vector<24x96xf32> to vector<24x8xf32>
    %70 = vector.extract_strided_slice %41 {offsets = [0, 40], sizes = [24, 8], strides = [1, 1]} : vector<24x96xf32> to vector<24x8xf32>
    %71 = vector.extract_strided_slice %41 {offsets = [0, 72], sizes = [24, 8], strides = [1, 1]} : vector<24x96xf32> to vector<24x8xf32>
    %72 = tpu.transpose %70, [1, 0] : vector<24x8xf32> -> vector<8x24xf32>
    %73 = arith.truncf %69 : vector<24x8xf32> to vector<24x8xbf16>
    %74 = arith.truncf %72 : vector<8x24xf32> to vector<8x24xbf16>
    %cst_28 = arith.constant dense<0.000000e+00> : vector<24x24xf32>
    %75 = tpu.matmul %73, %74, %cst_28 {dimension_numbers = #tpu.dot_dimension_numbers<[1], [0], [0], [1], [0, 0, 1, 1], [], []>} : vector<24x8xbf16>, vector<8x24xbf16>, vector<24x24xf32> -> vector<24x24xf32>
    %cst_29 = arith.constant 0.353553385 : f32
    %76 = vector.broadcast %cst_29 : f32 to vector<24x24xf32>
    %77 = arith.mulf %75, %76 : vector<24x24xf32>
    %cst_30 = arith.constant -1.000000e+30 : f32
    %78 = vector.broadcast %cst_30 : f32 to vector<24x24xf32>
    %79 = arith.select %44, %77, %78 : vector<24x24xi1>, vector<24x24xf32>
    %cst_31 = arith.constant dense<0xFF800000> : vector<24xf32>
    %80 = vector.multi_reduction <maximumf>, %79, %cst_31 [1] : vector<24x24xf32> to vector<24xf32>
    %81 = vector.shape_cast %80 : vector<24xf32> to vector<24x1xf32>
    %82 = vector.broadcast %81 : vector<24x1xf32> to vector<24x24xf32>
    %83 = arith.subf %79, %82 : vector<24x24xf32>
    %84 = math.exp %83 : vector<24x24xf32>
    %cst_32 = arith.constant dense<0.000000e+00> : vector<24xf32>
    %85 = vector.multi_reduction <add>, %84, %cst_32 [1] : vector<24x24xf32> to vector<24xf32>
    %86 = vector.shape_cast %85 : vector<24xf32> to vector<24x1xf32>
    %87 = tpu.reciprocal %86 {approx = true} : vector<24x1xf32> -> vector<24x1xf32>
    %88 = vector.broadcast %87 : vector<24x1xf32> to vector<24x24xf32>
    %89 = arith.mulf %84, %88 : vector<24x24xf32>
    %90 = arith.truncf %89 : vector<24x24xf32> to vector<24x24xbf16>
    %91 = arith.truncf %71 : vector<24x8xf32> to vector<24x8xbf16>
    %cst_33 = arith.constant dense<0.000000e+00> : vector<24x8xf32>
    %92 = tpu.matmul %90, %91, %cst_33 {dimension_numbers = #tpu.dot_dimension_numbers<[1], [0], [0], [1], [0, 0, 1, 1], [], []>} : vector<24x24xbf16>, vector<24x8xbf16>, vector<24x8xf32> -> vector<24x8xf32>
    %93 = vector.extract_strided_slice %41 {offsets = [0, 16], sizes = [24, 8], strides = [1, 1]} : vector<24x96xf32> to vector<24x8xf32>
    %94 = vector.extract_strided_slice %41 {offsets = [0, 48], sizes = [24, 8], strides = [1, 1]} : vector<24x96xf32> to vector<24x8xf32>
    %95 = vector.extract_strided_slice %41 {offsets = [0, 80], sizes = [24, 8], strides = [1, 1]} : vector<24x96xf32> to vector<24x8xf32>
    %96 = tpu.transpose %94, [1, 0] : vector<24x8xf32> -> vector<8x24xf32>
    %97 = arith.truncf %93 : vector<24x8xf32> to vector<24x8xbf16>
    %98 = arith.truncf %96 : vector<8x24xf32> to vector<8x24xbf16>
    %cst_34 = arith.constant dense<0.000000e+00> : vector<24x24xf32>
    %99 = tpu.matmul %97, %98, %cst_34 {dimension_numbers = #tpu.dot_dimension_numbers<[1], [0], [0], [1], [0, 0, 1, 1], [], []>} : vector<24x8xbf16>, vector<8x24xbf16>, vector<24x24xf32> -> vector<24x24xf32>
    %cst_35 = arith.constant 0.353553385 : f32
    %100 = vector.broadcast %cst_35 : f32 to vector<24x24xf32>
    %101 = arith.mulf %99, %100 : vector<24x24xf32>
    %cst_36 = arith.constant -1.000000e+30 : f32
    %102 = vector.broadcast %cst_36 : f32 to vector<24x24xf32>
    %103 = arith.select %44, %101, %102 : vector<24x24xi1>, vector<24x24xf32>
    %cst_37 = arith.constant dense<0xFF800000> : vector<24xf32>
    %104 = vector.multi_reduction <maximumf>, %103, %cst_37 [1] : vector<24x24xf32> to vector<24xf32>
    %105 = vector.shape_cast %104 : vector<24xf32> to vector<24x1xf32>
    %106 = vector.broadcast %105 : vector<24x1xf32> to vector<24x24xf32>
    %107 = arith.subf %103, %106 : vector<24x24xf32>
    %108 = math.exp %107 : vector<24x24xf32>
    %cst_38 = arith.constant dense<0.000000e+00> : vector<24xf32>
    %109 = vector.multi_reduction <add>, %108, %cst_38 [1] : vector<24x24xf32> to vector<24xf32>
    %110 = vector.shape_cast %109 : vector<24xf32> to vector<24x1xf32>
    %111 = tpu.reciprocal %110 {approx = true} : vector<24x1xf32> -> vector<24x1xf32>
    %112 = vector.broadcast %111 : vector<24x1xf32> to vector<24x24xf32>
    %113 = arith.mulf %108, %112 : vector<24x24xf32>
    %114 = arith.truncf %113 : vector<24x24xf32> to vector<24x24xbf16>
    %115 = arith.truncf %95 : vector<24x8xf32> to vector<24x8xbf16>
    %cst_39 = arith.constant dense<0.000000e+00> : vector<24x8xf32>
    %116 = tpu.matmul %114, %115, %cst_39 {dimension_numbers = #tpu.dot_dimension_numbers<[1], [0], [0], [1], [0, 0, 1, 1], [], []>} : vector<24x24xbf16>, vector<24x8xbf16>, vector<24x8xf32> -> vector<24x8xf32>
    %117 = vector.extract_strided_slice %41 {offsets = [0, 24], sizes = [24, 8], strides = [1, 1]} : vector<24x96xf32> to vector<24x8xf32>
    %118 = vector.extract_strided_slice %41 {offsets = [0, 56], sizes = [24, 8], strides = [1, 1]} : vector<24x96xf32> to vector<24x8xf32>
    %119 = vector.extract_strided_slice %41 {offsets = [0, 88], sizes = [24, 8], strides = [1, 1]} : vector<24x96xf32> to vector<24x8xf32>
    %120 = tpu.transpose %118, [1, 0] : vector<24x8xf32> -> vector<8x24xf32>
    %121 = arith.truncf %117 : vector<24x8xf32> to vector<24x8xbf16>
    %122 = arith.truncf %120 : vector<8x24xf32> to vector<8x24xbf16>
    %cst_40 = arith.constant dense<0.000000e+00> : vector<24x24xf32>
    %123 = tpu.matmul %121, %122, %cst_40 {dimension_numbers = #tpu.dot_dimension_numbers<[1], [0], [0], [1], [0, 0, 1, 1], [], []>} : vector<24x8xbf16>, vector<8x24xbf16>, vector<24x24xf32> -> vector<24x24xf32>
    %cst_41 = arith.constant 0.353553385 : f32
    %124 = vector.broadcast %cst_41 : f32 to vector<24x24xf32>
    %125 = arith.mulf %123, %124 : vector<24x24xf32>
    %cst_42 = arith.constant -1.000000e+30 : f32
    %126 = vector.broadcast %cst_42 : f32 to vector<24x24xf32>
    %127 = arith.select %44, %125, %126 : vector<24x24xi1>, vector<24x24xf32>
    %cst_43 = arith.constant dense<0xFF800000> : vector<24xf32>
    %128 = vector.multi_reduction <maximumf>, %127, %cst_43 [1] : vector<24x24xf32> to vector<24xf32>
    %129 = vector.shape_cast %128 : vector<24xf32> to vector<24x1xf32>
    %130 = vector.broadcast %129 : vector<24x1xf32> to vector<24x24xf32>
    %131 = arith.subf %127, %130 : vector<24x24xf32>
    %132 = math.exp %131 : vector<24x24xf32>
    %cst_44 = arith.constant dense<0.000000e+00> : vector<24xf32>
    %133 = vector.multi_reduction <add>, %132, %cst_44 [1] : vector<24x24xf32> to vector<24xf32>
    %134 = vector.shape_cast %133 : vector<24xf32> to vector<24x1xf32>
    %135 = tpu.reciprocal %134 {approx = true} : vector<24x1xf32> -> vector<24x1xf32>
    %136 = vector.broadcast %135 : vector<24x1xf32> to vector<24x24xf32>
    %137 = arith.mulf %132, %136 : vector<24x24xf32>
    %138 = arith.truncf %137 : vector<24x24xf32> to vector<24x24xbf16>
    %139 = arith.truncf %119 : vector<24x8xf32> to vector<24x8xbf16>
    %cst_45 = arith.constant dense<0.000000e+00> : vector<24x8xf32>
    %140 = tpu.matmul %138, %139, %cst_45 {dimension_numbers = #tpu.dot_dimension_numbers<[1], [0], [0], [1], [0, 0, 1, 1], [], []>} : vector<24x24xbf16>, vector<24x8xbf16>, vector<24x8xf32> -> vector<24x8xf32>
    %141 = tpu.concatenate %68, %92, %116, %140 in 1 : vector<24x8xf32>, vector<24x8xf32>, vector<24x8xf32>, vector<24x8xf32> -> vector<24x32xf32>
    %c0_46 = arith.constant 0 : index
    %c0_47 = arith.constant 0 : index
    %142 = vector.load %arg9[%c0_46, %c0_47] : memref<32x32xbf16, #tpu.memory_space<vmem>>, vector<32x32xbf16>
    %143 = arith.truncf %141 : vector<24x32xf32> to vector<24x32xbf16>
    %cst_48 = arith.constant dense<0.000000e+00> : vector<24x32xf32>
    %144 = tpu.matmul %143, %142, %cst_48 {dimension_numbers = #tpu.dot_dimension_numbers<[1], [0], [0], [1], [0, 0, 1, 1], [], []>} : vector<24x32xbf16>, vector<32x32xbf16>, vector<24x32xf32> -> vector<24x32xf32>
    %145 = arith.addf %9, %144 : vector<24x32xf32>
    %c0_49 = arith.constant 0 : index
    %c0_50 = arith.constant 0 : index
    %146 = vector.load %arg10[%c0_49, %c0_50] : memref<1x32xf32, #tpu.memory_space<vmem>>, vector<1x32xf32>
    %147 = vector.broadcast %146 : vector<1x32xf32> to vector<24x32xf32>
    %148 = arith.addf %145, %147 : vector<24x32xf32>
    %cst_51 = arith.constant dense<0.000000e+00> : vector<24xf32>
    %149 = vector.multi_reduction <add>, %148, %cst_51 [1] : vector<24x32xf32> to vector<24xf32>
    %150 = vector.shape_cast %149 : vector<24xf32> to vector<24x1xf32>
    %cst_52 = arith.constant 3.200000e+01 : f32
    %151 = vector.broadcast %cst_52 : f32 to vector<24x1xf32>
    %152 = arith.divf %150, %151 : vector<24x1xf32>
    %153 = vector.broadcast %152 : vector<24x1xf32> to vector<24x32xf32>
    %154 = arith.subf %148, %153 : vector<24x32xf32>
    %155 = vector.broadcast %152 : vector<24x1xf32> to vector<24x32xf32>
    %156 = arith.subf %148, %155 : vector<24x32xf32>
    %157 = arith.mulf %154, %156 : vector<24x32xf32>
    %cst_53 = arith.constant dense<0.000000e+00> : vector<24xf32>
    %158 = vector.multi_reduction <add>, %157, %cst_53 [1] : vector<24x32xf32> to vector<24xf32>
    %159 = vector.shape_cast %158 : vector<24xf32> to vector<24x1xf32>
    %cst_54 = arith.constant 3.200000e+01 : f32
    %160 = vector.broadcast %cst_54 : f32 to vector<24x1xf32>
    %161 = arith.divf %159, %160 : vector<24x1xf32>
    %162 = vector.broadcast %152 : vector<24x1xf32> to vector<24x32xf32>
    %163 = arith.subf %148, %162 : vector<24x32xf32>
    %cst_55 = arith.constant 9.99999974E-6 : f32
    %164 = vector.broadcast %cst_55 : f32 to vector<24x1xf32>
    %165 = arith.addf %161, %164 : vector<24x1xf32>
    %166 = math.rsqrt %165 : vector<24x1xf32>
    %167 = vector.broadcast %166 : vector<24x1xf32> to vector<24x32xf32>
    %168 = arith.mulf %163, %167 : vector<24x32xf32>
    %c0_56 = arith.constant 0 : index
    %c0_57 = arith.constant 0 : index
    %169 = vector.load %arg11[%c0_56, %c0_57] : memref<1x32xf32, #tpu.memory_space<vmem>>, vector<1x32xf32>
    %170 = vector.broadcast %169 : vector<1x32xf32> to vector<24x32xf32>
    %171 = arith.mulf %168, %170 : vector<24x32xf32>
    %c0_58 = arith.constant 0 : index
    %c0_59 = arith.constant 0 : index
    %172 = vector.load %arg12[%c0_58, %c0_59] : memref<1x32xf32, #tpu.memory_space<vmem>>, vector<1x32xf32>
    %173 = vector.broadcast %172 : vector<1x32xf32> to vector<24x32xf32>
    %174 = arith.addf %171, %173 : vector<24x32xf32>
    %c0_60 = arith.constant 0 : index
    %c0_61 = arith.constant 0 : index
    %175 = vector.load %arg13[%c0_60, %c0_61] : memref<32x128xbf16, #tpu.memory_space<vmem>>, vector<32x128xbf16>
    %176 = arith.truncf %174 : vector<24x32xf32> to vector<24x32xbf16>
    %cst_62 = arith.constant dense<0.000000e+00> : vector<24x128xf32>
    %177 = tpu.matmul %176, %175, %cst_62 {dimension_numbers = #tpu.dot_dimension_numbers<[1], [0], [0], [1], [0, 0, 1, 1], [], []>} : vector<24x32xbf16>, vector<32x128xbf16>, vector<24x128xf32> -> vector<24x128xf32>
    %c0_63 = arith.constant 0 : index
    %c0_64 = arith.constant 0 : index
    %178 = vector.load %arg14[%c0_63, %c0_64] : memref<1x128xf32, #tpu.memory_space<vmem>>, vector<1x128xf32>
    %179 = vector.broadcast %178 : vector<1x128xf32> to vector<24x128xf32>
    %180 = arith.addf %177, %179 : vector<24x128xf32>
    %cst_65 = arith.constant 5.000000e-01 : f32
    %181 = vector.broadcast %cst_65 : f32 to vector<24x128xf32>
    %182 = arith.mulf %181, %180 : vector<24x128xf32>
    %cst_66 = arith.constant 4.471500e-02 : f32
    %183 = vector.broadcast %cst_66 : f32 to vector<24x128xf32>
    %184 = arith.mulf %183, %180 : vector<24x128xf32>
    %185 = arith.mulf %184, %180 : vector<24x128xf32>
    %186 = arith.mulf %185, %180 : vector<24x128xf32>
    %187 = arith.addf %180, %186 : vector<24x128xf32>
    %cst_67 = arith.constant 0.797884583 : f32
    %188 = vector.broadcast %cst_67 : f32 to vector<24x128xf32>
    %189 = arith.mulf %188, %187 : vector<24x128xf32>
    %190 = math.tanh %189 : vector<24x128xf32>
    %cst_68 = arith.constant 1.000000e+00 : f32
    %191 = vector.broadcast %cst_68 : f32 to vector<24x128xf32>
    %192 = arith.addf %191, %190 : vector<24x128xf32>
    %193 = arith.mulf %182, %192 : vector<24x128xf32>
    %c0_69 = arith.constant 0 : index
    %c0_70 = arith.constant 0 : index
    %194 = vector.load %arg15[%c0_69, %c0_70] : memref<128x32xbf16, #tpu.memory_space<vmem>>, vector<128x32xbf16>
    %195 = arith.truncf %193 : vector<24x128xf32> to vector<24x128xbf16>
    %cst_71 = arith.constant dense<0.000000e+00> : vector<24x32xf32>
    %196 = tpu.matmul %195, %194, %cst_71 {dimension_numbers = #tpu.dot_dimension_numbers<[1], [0], [0], [1], [0, 0, 1, 1], [], []>} : vector<24x128xbf16>, vector<128x32xbf16>, vector<24x32xf32> -> vector<24x32xf32>
    %197 = arith.addf %148, %196 : vector<24x32xf32>
    %c0_72 = arith.constant 0 : index
    %c0_73 = arith.constant 0 : index
    %198 = vector.load %arg16[%c0_72, %c0_73] : memref<1x32xf32, #tpu.memory_space<vmem>>, vector<1x32xf32>
    %199 = vector.broadcast %198 : vector<1x32xf32> to vector<24x32xf32>
    %200 = arith.addf %197, %199 : vector<24x32xf32>
    %cst_74 = arith.constant dense<0.000000e+00> : vector<24xf32>
    %201 = vector.multi_reduction <add>, %200, %cst_74 [1] : vector<24x32xf32> to vector<24xf32>
    %202 = vector.shape_cast %201 : vector<24xf32> to vector<24x1xf32>
    %cst_75 = arith.constant 3.200000e+01 : f32
    %203 = vector.broadcast %cst_75 : f32 to vector<24x1xf32>
    %204 = arith.divf %202, %203 : vector<24x1xf32>
    %205 = vector.broadcast %204 : vector<24x1xf32> to vector<24x32xf32>
    %206 = arith.subf %200, %205 : vector<24x32xf32>
    %207 = vector.broadcast %204 : vector<24x1xf32> to vector<24x32xf32>
    %208 = arith.subf %200, %207 : vector<24x32xf32>
    %209 = arith.mulf %206, %208 : vector<24x32xf32>
    %cst_76 = arith.constant dense<0.000000e+00> : vector<24xf32>
    %210 = vector.multi_reduction <add>, %209, %cst_76 [1] : vector<24x32xf32> to vector<24xf32>
    %211 = vector.shape_cast %210 : vector<24xf32> to vector<24x1xf32>
    %cst_77 = arith.constant 3.200000e+01 : f32
    %212 = vector.broadcast %cst_77 : f32 to vector<24x1xf32>
    %213 = arith.divf %211, %212 : vector<24x1xf32>
    %214 = vector.broadcast %204 : vector<24x1xf32> to vector<24x32xf32>
    %215 = arith.subf %200, %214 : vector<24x32xf32>
    %cst_78 = arith.constant 9.99999974E-6 : f32
    %216 = vector.broadcast %cst_78 : f32 to vector<24x1xf32>
    %217 = arith.addf %213, %216 : vector<24x1xf32>
    %218 = math.rsqrt %217 : vector<24x1xf32>
    %219 = vector.broadcast %218 : vector<24x1xf32> to vector<24x32xf32>
    %220 = arith.mulf %215, %219 : vector<24x32xf32>
    %c0_79 = arith.constant 0 : index
    %c0_80 = arith.constant 0 : index
    %221 = vector.load %arg17[%c0_79, %c0_80] : memref<1x32xf32, #tpu.memory_space<vmem>>, vector<1x32xf32>
    %222 = vector.broadcast %221 : vector<1x32xf32> to vector<24x32xf32>
    %223 = arith.mulf %220, %222 : vector<24x32xf32>
    %c0_81 = arith.constant 0 : index
    %c0_82 = arith.constant 0 : index
    %224 = vector.load %arg18[%c0_81, %c0_82] : memref<1x32xf32, #tpu.memory_space<vmem>>, vector<1x32xf32>
    %225 = vector.broadcast %224 : vector<1x32xf32> to vector<24x32xf32>
    %226 = arith.addf %223, %225 : vector<24x32xf32>
    %c0_83 = arith.constant 0 : index
    %c0_84 = arith.constant 0 : index
    %227 = vector.load %arg19[%c0_83, %c0_84] : memref<1x32xbf16, #tpu.memory_space<vmem>>, vector<1x32xbf16>
    %228 = tpu.transpose %226, [1, 0] : vector<24x32xf32> -> vector<32x24xf32>
    %229 = arith.truncf %228 : vector<32x24xf32> to vector<32x24xbf16>
    %cst_85 = arith.constant dense<0.000000e+00> : vector<1x24xf32>
    %230 = tpu.matmul %227, %229, %cst_85 {dimension_numbers = #tpu.dot_dimension_numbers<[1], [0], [0], [1], [0, 0, 1, 1], [], []>} : vector<1x32xbf16>, vector<32x24xbf16>, vector<1x24xf32> -> vector<1x24xf32>
    %c0_86 = arith.constant 0 : index
    %c0_87 = arith.constant 0 : index
    %231 = vector.load %arg21[%c0_86, %c0_87] : memref<24x256xbf16, #tpu.memory_space<vmem>>, vector<24x256xbf16>
    %232 = arith.truncf %230 : vector<1x24xf32> to vector<1x24xbf16>
    %cst_88 = arith.constant dense<0.000000e+00> : vector<1x256xf32>
    %233 = tpu.matmul %232, %231, %cst_88 {dimension_numbers = #tpu.dot_dimension_numbers<[1], [0], [0], [1], [0, 0, 1, 1], [], []>} : vector<1x24xbf16>, vector<24x256xbf16>, vector<1x256xf32> -> vector<1x256xf32>
    %c0_89 = arith.constant 0 : index
    %c0_90 = arith.constant 0 : index
    %234 = vector.load %arg20[%c0_89, %c0_90] : memref<1x1xf32, #tpu.memory_space<vmem>>, vector<1x1xf32>
    %235 = vector.broadcast %234 : vector<1x1xf32> to vector<1x256xf32>
    %236 = arith.addf %233, %235 : vector<1x256xf32>
    %c0_91 = arith.constant 0 : index
    %c0_92 = arith.constant 0 : index
    %c0_93 = arith.constant 0 : index
    %237 = vector.load %arg22[%c0_91, %c0_92, %c0_93] : memref<1x1x256xf32, #tpu.memory_space<vmem>>, vector<1x1x256xf32>
    %238 = vector.shape_cast %237 : vector<1x1x256xf32> to vector<1x256xf32>
    %239 = vector.shape_cast %236 : vector<1x256xf32> to vector<1x1x256xf32>
    tpu.vector_store %arg22[%c0_91, %c0_92, %c0_93], %239 {strides = array<i32>} : memref<1x1x256xf32, #tpu.memory_space<vmem>>, vector<1x1x256xf32>,
    %cst_94 = arith.constant 0.000000e+00 : f32
    %240 = vector.broadcast %cst_94 : f32 to vector<1x256xf32>
    %241 = arith.subf %240, %236 : vector<1x256xf32>
    %242 = math.exp %241 : vector<1x256xf32>
    %cst_95 = arith.constant 1.000000e+00 : f32
    %243 = vector.broadcast %cst_95 : f32 to vector<1x256xf32>
    %244 = arith.addf %243, %242 : vector<1x256xf32>
    %245 = tpu.reciprocal %244 {approx = true} : vector<1x256xf32> -> vector<1x256xf32>
    %cst_96 = arith.constant 1.000000e+00 : f32
    %246 = vector.broadcast %cst_96 : f32 to vector<1x256xf32>
    %247 = arith.minimumf %245, %246 : vector<1x256xf32>
    %c0_97 = arith.constant 0 : index
    %c0_98 = arith.constant 0 : index
    %c0_99 = arith.constant 0 : index
    %248 = vector.load %arg23[%c0_97, %c0_98, %c0_99] : memref<1x1x256xf32, #tpu.memory_space<vmem>>, vector<1x1x256xf32>
    %249 = vector.shape_cast %248 : vector<1x1x256xf32> to vector<1x256xf32>
    %250 = vector.shape_cast %247 : vector<1x256xf32> to vector<1x1x256xf32>
    tpu.vector_store %arg23[%c0_97, %c0_98, %c0_99], %250 {strides = array<i32>} : memref<1x1x256xf32, #tpu.memory_space<vmem>>, vector<1x1x256xf32>,
    return
  }
  func.func @transform_0(%arg0: i32) -> (i32, i32, i32) {
    %c0_i32 = arith.constant 0 : i32
    %c0_i32_0 = arith.constant 0 : i32
    %c0_i32_1 = arith.constant 0 : i32
    return %arg0, %c0_i32, %c0_i32_0 : i32, i32, i32
  }
  func.func @transform_1(%arg0: i32) -> (i32, i32) {
    %c0_i32 = arith.constant 0 : i32
    %c0_i32_0 = arith.constant 0 : i32
    %c0_i32_1 = arith.constant 0 : i32
    return %c0_i32, %c0_i32_0 : i32, i32
  }
  func.func @transform_2(%arg0: i32) -> (i32, i32) {
    %c0_i32 = arith.constant 0 : i32
    %c0_i32_0 = arith.constant 0 : i32
    %c0_i32_1 = arith.constant 0 : i32
    return %c0_i32, %c0_i32_0 : i32, i32
  }
  func.func @transform_3(%arg0: i32) -> (i32, i32) {
    %c0_i32 = arith.constant 0 : i32
    %c0_i32_0 = arith.constant 0 : i32
    %c0_i32_1 = arith.constant 0 : i32
    return %c0_i32, %c0_i32_0 : i32, i32
  }
  func.func @transform_4(%arg0: i32) -> (i32, i32) {
    %c0_i32 = arith.constant 0 : i32
    %c0_i32_0 = arith.constant 0 : i32
    %c0_i32_1 = arith.constant 0 : i32
    return %c0_i32, %c0_i32_0 : i32, i32
  }
  func.func @transform_5(%arg0: i32) -> (i32, i32) {
    %c0_i32 = arith.constant 0 : i32
    %c0_i32_0 = arith.constant 0 : i32
    %c0_i32_1 = arith.constant 0 : i32
    return %c0_i32, %c0_i32_0 : i32, i32
  }
  func.func @transform_6(%arg0: i32) -> (i32, i32) {
    %c0_i32 = arith.constant 0 : i32
    %c0_i32_0 = arith.constant 0 : i32
    %c0_i32_1 = arith.constant 0 : i32
    return %c0_i32, %c0_i32_0 : i32, i32
  }
  func.func @transform_7(%arg0: i32) -> (i32, i32) {
    %c0_i32 = arith.constant 0 : i32
    %c0_i32_0 = arith.constant 0 : i32
    %c0_i32_1 = arith.constant 0 : i32
    return %c0_i32, %c0_i32_0 : i32, i32
  }
  func.func @transform_8(%arg0: i32) -> (i32, i32) {
    %c0_i32 = arith.constant 0 : i32
    %c0_i32_0 = arith.constant 0 : i32
    %c0_i32_1 = arith.constant 0 : i32
    return %c0_i32, %c0_i32_0 : i32, i32
  }
  func.func @transform_9(%arg0: i32) -> (i32, i32) {
    %c0_i32 = arith.constant 0 : i32
    %c0_i32_0 = arith.constant 0 : i32
    %c0_i32_1 = arith.constant 0 : i32
    return %c0_i32, %c0_i32_0 : i32, i32
  }
  func.func @transform_10(%arg0: i32) -> (i32, i32) {
    %c0_i32 = arith.constant 0 : i32
    %c0_i32_0 = arith.constant 0 : i32
    %c0_i32_1 = arith.constant 0 : i32
    return %c0_i32, %c0_i32_0 : i32, i32
  }
  func.func @transform_11(%arg0: i32) -> (i32, i32) {
    %c0_i32 = arith.constant 0 : i32
    %c0_i32_0 = arith.constant 0 : i32
    %c0_i32_1 = arith.constant 0 : i32
    return %c0_i32, %c0_i32_0 : i32, i32
  }
  func.func @transform_12(%arg0: i32) -> (i32, i32) {
    %c0_i32 = arith.constant 0 : i32
    %c0_i32_0 = arith.constant 0 : i32
    %c0_i32_1 = arith.constant 0 : i32
    return %c0_i32, %c0_i32_0 : i32, i32
  }
  func.func @transform_13(%arg0: i32) -> (i32, i32) {
    %c0_i32 = arith.constant 0 : i32
    %c0_i32_0 = arith.constant 0 : i32
    %c0_i32_1 = arith.constant 0 : i32
    return %c0_i32, %c0_i32_0 : i32, i32
  }
  func.func @transform_14(%arg0: i32) -> (i32, i32) {
    %c0_i32 = arith.constant 0 : i32
    %c0_i32_0 = arith.constant 0 : i32
    %c0_i32_1 = arith.constant 0 : i32
    return %c0_i32, %c0_i32_0 : i32, i32
  }
  func.func @transform_15(%arg0: i32) -> (i32, i32) {
    %c0_i32 = arith.constant 0 : i32
    %c0_i32_0 = arith.constant 0 : i32
    %c0_i32_1 = arith.constant 0 : i32
    return %c0_i32, %c0_i32_0 : i32, i32
  }
  func.func @transform_16(%arg0: i32) -> (i32, i32) {
    %c0_i32 = arith.constant 0 : i32
    %c0_i32_0 = arith.constant 0 : i32
    %c0_i32_1 = arith.constant 0 : i32
    return %c0_i32, %c0_i32_0 : i32, i32
  }
  func.func @transform_17(%arg0: i32) -> (i32, i32) {
    %c0_i32 = arith.constant 0 : i32
    %c0_i32_0 = arith.constant 0 : i32
    %c0_i32_1 = arith.constant 0 : i32
    return %c0_i32, %c0_i32_0 : i32, i32
  }
  func.func @transform_18(%arg0: i32) -> (i32, i32) {
    %c0_i32 = arith.constant 0 : i32
    %c0_i32_0 = arith.constant 0 : i32
    %c0_i32_1 = arith.constant 0 : i32
    return %c0_i32, %c0_i32_0 : i32, i32
  }
  func.func @transform_19(%arg0: i32) -> (i32, i32) {
    %c0_i32 = arith.constant 0 : i32
    %c0_i32_0 = arith.constant 0 : i32
    %c0_i32_1 = arith.constant 0 : i32
    return %c0_i32, %c0_i32_0 : i32, i32
  }
  func.func @transform_20(%arg0: i32) -> (i32, i32) {
    %c0_i32 = arith.constant 0 : i32
    %c0_i32_0 = arith.constant 0 : i32
    %c0_i32_1 = arith.constant 0 : i32
    return %c0_i32, %c0_i32_0 : i32, i32
  }
  func.func @transform_21(%arg0: i32) -> (i32, i32, i32) {
    %c0_i32 = arith.constant 0 : i32
    %c0_i32_0 = arith.constant 0 : i32
    %c0_i32_1 = arith.constant 0 : i32
    return %arg0, %c0_i32, %c0_i32_0 : i32, i32, i32
  }
  func.func @transform_22(%arg0: i32) -> (i32, i32, i32) {
    %c0_i32 = arith.constant 0 : i32
    %c0_i32_0 = arith.constant 0 : i32
    %c0_i32_1 = arith.constant 0 : i32
    return %arg0, %c0_i32, %c0_i32_0 : i32, i32, i32
  }
}

</mosaic_0001>

<llo_original>
// kernel: segmenter_forward.1
$region0: #{segmenter_forward.1}
  #allocation0 [shape = 'u32[]', space=smem, size = 0x4, offset = 0x4, fixed_abs, tag = 'smem constant byte address 0x4 - core index']
  #allocation1 [shape = 'u32[144,128]{1,0:T(1,128)}', space=vmem, size = 0x12000, scoped, tag = 'internal scratch']
  #allocation2 [shape = 'f32[1,1]{1,0:T(1,128)S(1)}', space=vmem, size = 0x200, scoped, tag = 'scoped memory for segmenter_forward.1']
  %s0 = inlined_call_operand.vmem [shape: f32[2,24,48], index: 0, kind: input, shape index: {}]
  %s1 = inlined_call_operand.vmem [shape: bf16[48,32], index: 1, kind: input, shape index: {}]
  %s2 = inlined_call_operand.vmem [shape: f32[1,32], index: 2, kind: input, shape index: {}]
  %s3 = inlined_call_operand.vmem [shape: f32[24,32], index: 3, kind: input, shape index: {}]
  %s4 = inlined_call_operand.vmem [shape: f32[1,32], index: 4, kind: input, shape index: {}]
  %s5 = inlined_call_operand.vmem [shape: f32[1,32], index: 5, kind: input, shape index: {}]
  %s6 = inlined_call_operand.vmem [shape: bf16[32,96], index: 6, kind: input, shape index: {}]
  %s7 = inlined_call_operand.vmem [shape: f32[1,96], index: 7, kind: input, shape index: {}]
  %s8 = inlined_call_operand.vmem [shape: bf16[32,32], index: 8, kind: input, shape index: {}]
  %s9 = inlined_call_operand.vmem [shape: f32[1,32], index: 9, kind: input, shape index: {}]
  %s10 = inlined_call_operand.vmem [shape: f32[1,32], index: 10, kind: input, shape index: {}]
  %s11 = inlined_call_operand.vmem [shape: f32[1,32], index: 11, kind: input, shape index: {}]
  %s12 = inlined_call_operand.vmem [shape: bf16[32,128], index: 12, kind: input, shape index: {}]
  %s13 = inlined_call_operand.vmem [shape: f32[1,128], index: 13, kind: input, shape index: {}]
  %s14 = inlined_call_operand.vmem [shape: bf16[128,32], index: 14, kind: input, shape index: {}]
  %s15 = inlined_call_operand.vmem [shape: f32[1,32], index: 15, kind: input, shape index: {}]
  %s16 = inlined_call_operand.vmem [shape: f32[1,32], index: 16, kind: input, shape index: {}]
  %s17 = inlined_call_operand.vmem [shape: f32[1,32], index: 17, kind: input, shape index: {}]
  %s18 = inlined_call_operand.vmem [shape: bf16[1,32], index: 18, kind: input, shape index: {}]
  %s19 = inlined_call_operand.<no memory space> [shape: f32[1,1], index: 19, kind: input, shape index: {}]
  %s20 = inlined_call_operand.vmem [shape: bf16[24,256], index: 20, kind: input, shape index: {}]
  %s21 = inlined_call_operand.vmem [shape: f32[2,1,256], index: 21, kind: output, shape index: {0}]
  %s22 = inlined_call_operand.vmem [shape: f32[2,1,256], index: 22, kind: output, shape index: {1}]
  %23 = xla_tuple %s21, %s22
  %s24 = sld [smem:[#allocation0]]
  $region125: #{segmenter_forward.1} parent=0
    _
  %s26 = ssub.s32 1, %s24
  %s27 = scalar_select 0, %s26, %s24
  %v28 = vstv %s19
  %29 = vst [vmem:[#allocation2] sm:$0x1] %v28
  loop: start=0, step=1, limit=4
  $region2: #{segmenter_forward.1} parent=0 // loop_pre_header
    _
  $region3: #{segmenter_forward.1} parent=0 // loop_header
    %s31 = sphi 0, %s35
    %p32 = scmp.ge.s32.totalorder %s31, 4
    %s41 = sphi 0, %s43
    %s44 = sphi 0, %s41
    %s45 = sphi 0, %s44
    %s61 = sphi 0, %s45
    %s65 = sphi 0, %s65
    %s67 = sphi 0, %s65
    %s68 = sphi 0, %s67
    %s82 = sphi 0, %s68
    %s86 = sphi 0, %s86
    %s88 = sphi 0, %s86
    %s89 = sphi 0, %s88
    %s103 = sphi 0, %s89
    %s107 = sphi 0, %s107
    %s109 = sphi 0, %s107
    %s110 = sphi 0, %s109
    %s124 = sphi 0, %s110
    %s128 = sphi 0, %s128
    %s130 = sphi 0, %s128
    %s131 = sphi 0, %s130
    %s145 = sphi 0, %s131
    %s149 = sphi 0, %s149
    %s151 = sphi 0, %s149
    %s152 = sphi 0, %s151
    %s166 = sphi 0, %s152
    %s170 = sphi 0, %s170
    %s172 = sphi 0, %s170
    %s173 = sphi 0, %s172
    %s187 = sphi 0, %s173
    %s191 = sphi 0, %s191
    %s193 = sphi 0, %s191
    %s194 = sphi 0, %s193
    %s208 = sphi 0, %s194
    %s212 = sphi 0, %s212
    %s214 = sphi 0, %s212
    %s215 = sphi 0, %s214
    %s229 = sphi 0, %s215
    %s233 = sphi 0, %s233
    %s235 = sphi 0, %s233
    %s236 = sphi 0, %s235
    %s250 = sphi 0, %s236
    %s254 = sphi 0, %s254
    %s256 = sphi 0, %s254
    %s257 = sphi 0, %s256
    %s271 = sphi 0, %s257
    %s275 = sphi 0, %s275
    %s277 = sphi 0, %s275
    %s278 = sphi 0, %s277
    %s292 = sphi 0, %s278
    %s296 = sphi 0, %s296
    %s298 = sphi 0, %s296
    %s299 = sphi 0, %s298
    %s313 = sphi 0, %s299
    %s317 = sphi 0, %s317
    %s319 = sphi 0, %s317
    %s320 = sphi 0, %s319
    %s334 = sphi 0, %s320
    %s338 = sphi 0, %s338
    %s340 = sphi 0, %s338
    %s341 = sphi 0, %s340
    %s355 = sphi 0, %s341
    %s359 = sphi 0, %s359
    %s361 = sphi 0, %s359
    %s362 = sphi 0, %s361
    %s376 = sphi 0, %s362
    %s380 = sphi 0, %s380
    %s382 = sphi 0, %s380
    %s383 = sphi 0, %s382
    %s397 = sphi 0, %s383
    %s401 = sphi 0, %s401
    %s403 = sphi 0, %s401
    %s404 = sphi 0, %s403
    %s418 = sphi 0, %s404
    %s422 = sphi 0, %s422
    %s424 = sphi 0, %s422
    %s425 = sphi 0, %s424
    %s439 = sphi 0, %s425
    %s443 = sphi 0, %s443
    %s445 = sphi 0, %s443
    %s446 = sphi 0, %s445
    %s460 = sphi 0, %s446
    %s464 = sphi 0, %s464
    %s466 = sphi 0, %s464
    %s467 = sphi 0, %s466
    %s481 = sphi 0, %s467
    %s487 = sphi 0, %s489
    %s490 = sphi 0, %s487
    %s491 = sphi 0, %s490
    %s507 = sphi 0, %s491
    %s513 = sphi 0, %s515
    %s516 = sphi 0, %s513
    %s517 = sphi 0, %s516
    %s533 = sphi 0, %s517
  $region4: #{segmenter_forward.1} parent=0 // loop_header_branch
    %34 = sbr.rel (%p32) target = $region8
  $region5: #{segmenter_forward.1} parent=0 // loop_body
    %s36 = ssub.s32 %s31, 1
    %s37 = ssub.s32 %s31, 2
    %s38 = sadd.s32 %s31, 1
    %s39 = ssub.s32 %s31, %s38
    %p40 = scmp.eq.s32.totalorder %s39, 0
    %s42 = sadd.s32 %s41, 1
    %s43 = scalar_select %p40, %s41, %s42
    %p46 = pneg %p40
    %p47 = scmp.eq.s32.totalorder %s31, 1
    %p48 = por %p46, %p47
    %p49 = scmp.ne.s32.totalorder %s41, %s44
    %p50 = scmp.eq.s32.totalorder %s31, 0
    %p51 = por %p49, %p50
    %p52 = scmp.ne.s32.totalorder %s41, %s44
    %p53 = scmp.eq.s32.totalorder %s36, 1
    %p54 = por %p52, %p53
    %p55 = scmp.ne.s32.totalorder %s44, %s45
    %p56 = scmp.eq.s32.totalorder %s36, 0
    %p57 = por %p55, %p56
    %p58 = scmp.ne.s32.totalorder %s44, %s45
    %p59 = scmp.eq.s32.totalorder %s37, 1
    %p60 = por %p58, %p59
    %p62 = scmp.ne.s32.totalorder %s45, %s61
    %p63 = scmp.eq.s32.totalorder %s37, 0
    %p64 = por %p62, %p63
    %s66 = sadd.s32 %s65, 1
    %p69 = scmp.eq.s32.totalorder %s31, 1
    %p70 = scmp.ne.s32.totalorder %s65, %s67
    %p71 = scmp.eq.s32.totalorder %s31, 0
    %p72 = por %p70, %p71
    %p73 = scmp.ne.s32.totalorder %s65, %s67
    %p74 = scmp.eq.s32.totalorder %s36, 1
    %p75 = por %p73, %p74
    %p76 = scmp.ne.s32.totalorder %s67, %s68
    %p77 = scmp.eq.s32.totalorder %s36, 0
    %p78 = por %p76, %p77
    %p79 = scmp.ne.s32.totalorder %s67, %s68
    %p80 = scmp.eq.s32.totalorder %s37, 1
    %p81 = por %p79, %p80
    %p83 = scmp.ne.s32.totalorder %s68, %s82
    %p84 = scmp.eq.s32.totalorder %s37, 0
    %p85 = por %p83, %p84
    %s87 = sadd.s32 %s86, 1
    %p90 = scmp.eq.s32.totalorder %s31, 1
    %p91 = scmp.ne.s32.totalorder %s86, %s88
    %p92 = scmp.eq.s32.totalorder %s31, 0
    %p93 = por %p91, %p92
    %p94 = scmp.ne.s32.totalorder %s86, %s88
    %p95 = scmp.eq.s32.totalorder %s36, 1
    %p96 = por %p94, %p95
    %p97 = scmp.ne.s32.totalorder %s88, %s89
    %p98 = scmp.eq.s32.totalorder %s36, 0
    %p99 = por %p97, %p98
    %p100 = scmp.ne.s32.totalorder %s88, %s89
    %p101 = scmp.eq.s32.totalorder %s37, 1
    %p102 = por %p100, %p101
    %p104 = scmp.ne.s32.totalorder %s89, %s103
    %p105 = scmp.eq.s32.totalorder %s37, 0
    %p106 = por %p104, %p105
    %s108 = sadd.s32 %s107, 1
    %p111 = scmp.eq.s32.totalorder %s31, 1
    %p112 = scmp.ne.s32.totalorder %s107, %s109
    %p113 = scmp.eq.s32.totalorder %s31, 0
    %p114 = por %p112, %p113
    %p115 = scmp.ne.s32.totalorder %s107, %s109
    %p116 = scmp.eq.s32.totalorder %s36, 1
    %p117 = por %p115, %p116
    %p118 = scmp.ne.s32.totalorder %s109, %s110
    %p119 = scmp.eq.s32.totalorder %s36, 0
    %p120 = por %p118, %p119
    %p121 = scmp.ne.s32.totalorder %s109, %s110
    %p122 = scmp.eq.s32.totalorder %s37, 1
    %p123 = por %p121, %p122
    %p125 = scmp.ne.s32.totalorder %s110, %s124
    %p126 = scmp.eq.s32.totalorder %s37, 0
    %p127 = por %p125, %p126
    %s129 = sadd.s32 %s128, 1
    %p132 = scmp.eq.s32.totalorder %s31, 1
    %p133 = scmp.ne.s32.totalorder %s128, %s130
    %p134 = scmp.eq.s32.totalorder %s31, 0
    %p135 = por %p133, %p134
    %p136 = scmp.ne.s32.totalorder %s128, %s130
    %p137 = scmp.eq.s32.totalorder %s36, 1
    %p138 = por %p136, %p137
    %p139 = scmp.ne.s32.totalorder %s130, %s131
    %p140 = scmp.eq.s32.totalorder %s36, 0
    %p141 = por %p139, %p140
    %p142 = scmp.ne.s32.totalorder %s130, %s131
    %p143 = scmp.eq.s32.totalorder %s37, 1
    %p144 = por %p142, %p143
    %p146 = scmp.ne.s32.totalorder %s131, %s145
    %p147 = scmp.eq.s32.totalorder %s37, 0
    %p148 = por %p146, %p147
    %s150 = sadd.s32 %s149, 1
    %p153 = scmp.eq.s32.totalorder %s31, 1
    %p154 = scmp.ne.s32.totalorder %s149, %s151
    %p155 = scmp.eq.s32.totalorder %s31, 0
    %p156 = por %p154, %p155
    %p157 = scmp.ne.s32.totalorder %s149, %s151
    %p158 = scmp.eq.s32.totalorder %s36, 1
    %p159 = por %p157, %p158
    %p160 = scmp.ne.s32.totalorder %s151, %s152
    %p161 = scmp.eq.s32.totalorder %s36, 0
    %p162 = por %p160, %p161
    %p163 = scmp.ne.s32.totalorder %s151, %s152
    %p164 = scmp.eq.s32.totalorder %s37, 1
    %p165 = por %p163, %p164
    %p167 = scmp.ne.s32.totalorder %s152, %s166
    %p168 = scmp.eq.s32.totalorder %s37, 0
    %p169 = por %p167, %p168
    %s171 = sadd.s32 %s170, 1
    %p174 = scmp.eq.s32.totalorder %s31, 1
    %p175 = scmp.ne.s32.totalorder %s170, %s172
    %p176 = scmp.eq.s32.totalorder %s31, 0
    %p177 = por %p175, %p176
    %p178 = scmp.ne.s32.totalorder %s170, %s172
    %p179 = scmp.eq.s32.totalorder %s36, 1
    %p180 = por %p178, %p179
    %p181 = scmp.ne.s32.totalorder %s172, %s173
    %p182 = scmp.eq.s32.totalorder %s36, 0
    %p183 = por %p181, %p182
    %p184 = scmp.ne.s32.totalorder %s172, %s173
    %p185 = scmp.eq.s32.totalorder %s37, 1
    %p186 = por %p184, %p185
    %p188 = scmp.ne.s32.totalorder %s173, %s187
    %p189 = scmp.eq.s32.totalorder %s37, 0
    %p190 = por %p188, %p189
    %s192 = sadd.s32 %s191, 1
    %p195 = scmp.eq.s32.totalorder %s31, 1
    %p196 = scmp.ne.s32.totalorder %s191, %s193
    %p197 = scmp.eq.s32.totalorder %s31, 0
    %p198 = por %p196, %p197
    %p199 = scmp.ne.s32.totalorder %s191, %s193
    %p200 = scmp.eq.s32.totalorder %s36, 1
    %p201 = por %p199, %p200
    %p202 = scmp.ne.s32.totalorder %s193, %s194
    %p203 = scmp.eq.s32.totalorder %s36, 0
    %p204 = por %p202, %p203
    %p205 = scmp.ne.s32.totalorder %s193, %s194
    %p206 = scmp.eq.s32.totalorder %s37, 1
    %p207 = por %p205, %p206
    %p209 = scmp.ne.s32.totalorder %s194, %s208
    %p210 = scmp.eq.s32.totalorder %s37, 0
    %p211 = por %p209, %p210
    %s213 = sadd.s32 %s212, 1
    %p216 = scmp.eq.s32.totalorder %s31, 1
    %p217 = scmp.ne.s32.totalorder %s212, %s214
    %p218 = scmp.eq.s32.totalorder %s31, 0
    %p219 = por %p217, %p218
    %p220 = scmp.ne.s32.totalorder %s212, %s214
    %p221 = scmp.eq.s32.totalorder %s36, 1
    %p222 = por %p220, %p221
    %p223 = scmp.ne.s32.totalorder %s214, %s215
    %p224 = scmp.eq.s32.totalorder %s36, 0
    %p225 = por %p223, %p224
    %p226 = scmp.ne.s32.totalorder %s214, %s215
    %p227 = scmp.eq.s32.totalorder %s37, 1
    %p228 = por %p226, %p227
    %p230 = scmp.ne.s32.totalorder %s215, %s229
    %p231 = scmp.eq.s32.totalorder %s37, 0
    %p232 = por %p230, %p231
    %s234 = sadd.s32 %s233, 1
    %p237 = scmp.eq.s32.totalorder %s31, 1
    %p238 = scmp.ne.s32.totalorder %s233, %s235
    %p239 = scmp.eq.s32.totalorder %s31, 0
    %p240 = por %p238, %p239
    %p241 = scmp.ne.s32.totalorder %s233, %s235
    %p242 = scmp.eq.s32.totalorder %s36, 1
    %p243 = por %p241, %p242
    %p244 = scmp.ne.s32.totalorder %s235, %s236
    %p245 = scmp.eq.s32.totalorder %s36, 0
    %p246 = por %p244, %p245
    %p247 = scmp.ne.s32.totalorder %s235, %s236
    %p248 = scmp.eq.s32.totalorder %s37, 1
    %p249 = por %p247, %p248
    %p251 = scmp.ne.s32.totalorder %s236, %s250
    %p252 = scmp.eq.s32.totalorder %s37, 0
    %p253 = por %p251, %p252
    %s255 = sadd.s32 %s254, 1
    %p258 = scmp.eq.s32.totalorder %s31, 1
    %p259 = scmp.ne.s32.totalorder %s254, %s256
    %p260 = scmp.eq.s32.totalorder %s31, 0
    %p261 = por %p259, %p260
    %p262 = scmp.ne.s32.totalorder %s254, %s256
    %p263 = scmp.eq.s32.totalorder %s36, 1
    %p264 = por %p262, %p263
    %p265 = scmp.ne.s32.totalorder %s256, %s257
    %p266 = scmp.eq.s32.totalorder %s36, 0
    %p267 = por %p265, %p266
    %p268 = scmp.ne.s32.totalorder %s256, %s257
    %p269 = scmp.eq.s32.totalorder %s37, 1
    %p270 = por %p268, %p269
    %p272 = scmp.ne.s32.totalorder %s257, %s271
    %p273 = scmp.eq.s32.totalorder %s37, 0
    %p274 = por %p272, %p273
    %s276 = sadd.s32 %s275, 1
    %p279 = scmp.eq.s32.totalorder %s31, 1
    %p280 = scmp.ne.s32.totalorder %s275, %s277
    %p281 = scmp.eq.s32.totalorder %s31, 0
    %p282 = por %p280, %p281
    %p283 = scmp.ne.s32.totalorder %s275, %s277
    %p284 = scmp.eq.s32.totalorder %s36, 1
    %p285 = por %p283, %p284
    %p286 = scmp.ne.s32.totalorder %s277, %s278
    %p287 = scmp.eq.s32.totalorder %s36, 0
    %p288 = por %p286, %p287
    %p289 = scmp.ne.s32.totalorder %s277, %s278
    %p290 = scmp.eq.s32.totalorder %s37, 1
    %p291 = por %p289, %p290
    %p293 = scmp.ne.s32.totalorder %s278, %s292
    %p294 = scmp.eq.s32.totalorder %s37, 0
    %p295 = por %p293, %p294
    %s297 = sadd.s32 %s296, 1
    %p300 = scmp.eq.s32.totalorder %s31, 1
    %p301 = scmp.ne.s32.totalorder %s296, %s298
    %p302 = scmp.eq.s32.totalorder %s31, 0
    %p303 = por %p301, %p302
    %p304 = scmp.ne.s32.totalorder %s296, %s298
    %p305 = scmp.eq.s32.totalorder %s36, 1
    %p306 = por %p304, %p305
    %p307 = scmp.ne.s32.totalorder %s298, %s299
    %p308 = scmp.eq.s32.totalorder %s36, 0
    %p309 = por %p307, %p308
    %p310 = scmp.ne.s32.totalorder %s298, %s299
    %p311 = scmp.eq.s32.totalorder %s37, 1
    %p312 = por %p310, %p311
    %p314 = scmp.ne.s32.totalorder %s299, %s313
    %p315 = scmp.eq.s32.totalorder %s37, 0
    %p316 = por %p314, %p315
    %s318 = sadd.s32 %s317, 1
    %p321 = scmp.eq.s32.totalorder %s31, 1
    %p322 = scmp.ne.s32.totalorder %s317, %s319
    %p323 = scmp.eq.s32.totalorder %s31, 0
    %p324 = por %p322, %p323
    %p325 = scmp.ne.s32.totalorder %s317, %s319
    %p326 = scmp.eq.s32.totalorder %s36, 1
    %p327 = por %p325, %p326
    %p328 = scmp.ne.s32.totalorder %s319, %s320
    %p329 = scmp.eq.s32.totalorder %s36, 0
    %p330 = por %p328, %p329
    %p331 = scmp.ne.s32.totalorder %s319, %s320
    %p332 = scmp.eq.s32.totalorder %s37, 1
    %p333 = por %p331, %p332
    %p335 = scmp.ne.s32.totalorder %s320, %s334
    %p336 = scmp.eq.s32.totalorder %s37, 0
    %p337 = por %p335, %p336
    %s339 = sadd.s32 %s338, 1
    %p342 = scmp.eq.s32.totalorder %s31, 1
    %p343 = scmp.ne.s32.totalorder %s338, %s340
    %p344 = scmp.eq.s32.totalorder %s31, 0
    %p345 = por %p343, %p344
    %p346 = scmp.ne.s32.totalorder %s338, %s340
    %p347 = scmp.eq.s32.totalorder %s36, 1
    %p348 = por %p346, %p347
    %p349 = scmp.ne.s32.totalorder %s340, %s341
    %p350 = scmp.eq.s32.totalorder %s36, 0
    %p351 = por %p349, %p350
    %p352 = scmp.ne.s32.totalorder %s340, %s341
    %p353 = scmp.eq.s32.totalorder %s37, 1
    %p354 = por %p352, %p353
    %p356 = scmp.ne.s32.totalorder %s341, %s355
    %p357 = scmp.eq.s32.totalorder %s37, 0
    %p358 = por %p356, %p357
    %s360 = sadd.s32 %s359, 1
    %p363 = scmp.eq.s32.totalorder %s31, 1
    %p364 = scmp.ne.s32.totalorder %s359, %s361
    %p365 = scmp.eq.s32.totalorder %s31, 0
    %p366 = por %p364, %p365
    %p367 = scmp.ne.s32.totalorder %s359, %s361
    %p368 = scmp.eq.s32.totalorder %s36, 1
    %p369 = por %p367, %p368
    %p370 = scmp.ne.s32.totalorder %s361, %s362
    %p371 = scmp.eq.s32.totalorder %s36, 0
    %p372 = por %p370, %p371
    %p373 = scmp.ne.s32.totalorder %s361, %s362
    %p374 = scmp.eq.s32.totalorder %s37, 1
    %p375 = por %p373, %p374
    %p377 = scmp.ne.s32.totalorder %s362, %s376
    %p378 = scmp.eq.s32.totalorder %s37, 0
    %p379 = por %p377, %p378
    %s381 = sadd.s32 %s380, 1
    %p384 = scmp.eq.s32.totalorder %s31, 1
    %p385 = scmp.ne.s32.totalorder %s380, %s382
    %p386 = scmp.eq.s32.totalorder %s31, 0
    %p387 = por %p385, %p386
    %p388 = scmp.ne.s32.totalorder %s380, %s382
    %p389 = scmp.eq.s32.totalorder %s36, 1
    %p390 = por %p388, %p389
    %p391 = scmp.ne.s32.totalorder %s382, %s383
    %p392 = scmp.eq.s32.totalorder %s36, 0
    %p393 = por %p391, %p392
    %p394 = scmp.ne.s32.totalorder %s382, %s383
    %p395 = scmp.eq.s32.totalorder %s37, 1
    %p396 = por %p394, %p395
    %p398 = scmp.ne.s32.totalorder %s383, %s397
    %p399 = scmp.eq.s32.totalorder %s37, 0
    %p400 = por %p398, %p399
    %s402 = sadd.s32 %s401, 1
    %p405 = scmp.eq.s32.totalorder %s31, 1
    %p406 = scmp.ne.s32.totalorder %s401, %s403
    %p407 = scmp.eq.s32.totalorder %s31, 0
    %p408 = por %p406, %p407
    %p409 = scmp.ne.s32.totalorder %s401, %s403
    %p410 = scmp.eq.s32.totalorder %s36, 1
    %p411 = por %p409, %p410
    %p412 = scmp.ne.s32.totalorder %s403, %s404
    %p413 = scmp.eq.s32.totalorder %s36, 0
    %p414 = por %p412, %p413
    %p415 = scmp.ne.s32.totalorder %s403, %s404
    %p416 = scmp.eq.s32.totalorder %s37, 1
    %p417 = por %p415, %p416
    %p419 = scmp.ne.s32.totalorder %s404, %s418
    %p420 = scmp.eq.s32.totalorder %s37, 0
    %p421 = por %p419, %p420
    %s423 = sadd.s32 %s422, 1
    %p426 = scmp.eq.s32.totalorder %s31, 1
    %p427 = scmp.ne.s32.totalorder %s422, %s424
    %p428 = scmp.eq.s32.totalorder %s31, 0
    %p429 = por %p427, %p428
    %p430 = scmp.ne.s32.totalorder %s422, %s424
    %p431 = scmp.eq.s32.totalorder %s36, 1
    %p432 = por %p430, %p431
    %p433 = scmp.ne.s32.totalorder %s424, %s425
    %p434 = scmp.eq.s32.totalorder %s36, 0
    %p435 = por %p433, %p434
    %p436 = scmp.ne.s32.totalorder %s424, %s425
    %p437 = scmp.eq.s32.totalorder %s37, 1
    %p438 = por %p436, %p437
    %p440 = scmp.ne.s32.totalorder %s425, %s439
    %p441 = scmp.eq.s32.totalorder %s37, 0
    %p442 = por %p440, %p441
    %s444 = sadd.s32 %s443, 1
    %p447 = scmp.eq.s32.totalorder %s31, 1
    %p448 = scmp.ne.s32.totalorder %s443, %s445
    %p449 = scmp.eq.s32.totalorder %s31, 0
    %p450 = por %p448, %p449
    %p451 = scmp.ne.s32.totalorder %s443, %s445
    %p452 = scmp.eq.s32.totalorder %s36, 1
    %p453 = por %p451, %p452
    %p454 = scmp.ne.s32.totalorder %s445, %s446
    %p455 = scmp.eq.s32.totalorder %s36, 0
    %p456 = por %p454, %p455
    %p457 = scmp.ne.s32.totalorder %s445, %s446
    %p458 = scmp.eq.s32.totalorder %s37, 1
    %p459 = por %p457, %p458
    %p461 = scmp.ne.s32.totalorder %s446, %s460
    %p462 = scmp.eq.s32.totalorder %s37, 0
    %p463 = por %p461, %p462
    %s465 = sadd.s32 %s464, 1
    %p468 = scmp.eq.s32.totalorder %s31, 1
    %p469 = scmp.ne.s32.totalorder %s464, %s466
    %p470 = scmp.eq.s32.totalorder %s31, 0
    %p471 = por %p469, %p470
    %p472 = scmp.ne.s32.totalorder %s464, %s466
    %p473 = scmp.eq.s32.totalorder %s36, 1
    %p474 = por %p472, %p473
    %p475 = scmp.ne.s32.totalorder %s466, %s467
    %p476 = scmp.eq.s32.totalorder %s36, 0
    %p477 = por %p475, %p476
    %p478 = scmp.ne.s32.totalorder %s466, %s467
    %p479 = scmp.eq.s32.totalorder %s37, 1
    %p480 = por %p478, %p479
    %p482 = scmp.ne.s32.totalorder %s467, %s481
    %p483 = scmp.eq.s32.totalorder %s37, 0
    %p484 = por %p482, %p483
    %s485 = ssub.s32 %s31, %s38
    %p486 = scmp.eq.s32.totalorder %s485, 0
    %s488 = sadd.s32 %s487, 1
    %s489 = scalar_select %p486, %s487, %s488
    %p492 = pneg %p486
    %p493 = scmp.eq.s32.totalorder %s31, 1
    %p494 = por %p492, %p493
    %p495 = scmp.ne.s32.totalorder %s487, %s490
    %p496 = scmp.eq.s32.totalorder %s31, 0
    %p497 = por %p495, %p496
    %p498 = scmp.ne.s32.totalorder %s487, %s490
    %p499 = scmp.eq.s32.totalorder %s36, 1
    %p500 = por %p498, %p499
    %p501 = scmp.ne.s32.totalorder %s490, %s491
    %p502 = scmp.eq.s32.totalorder %s36, 0
    %p503 = por %p501, %p502
    %p504 = scmp.ne.s32.totalorder %s490, %s491
    %p505 = scmp.eq.s32.totalorder %s37, 1
    %p506 = por %p504, %p505
    %p508 = scmp.ne.s32.totalorder %s491, %s507
    %p509 = scmp.eq.s32.totalorder %s37, 0
    %p510 = por %p508, %p509
    %s511 = ssub.s32 %s31, %s38
    %p512 = scmp.eq.s32.totalorder %s511, 0
    %s514 = sadd.s32 %s513, 1
    %s515 = scalar_select %p512, %s513, %s514
    %p518 = pneg %p512
    %p519 = scmp.eq.s32.totalorder %s31, 1
    %p520 = por %p518, %p519
    %p521 = scmp.ne.s32.totalorder %s513, %s516
    %p522 = scmp.eq.s32.totalorder %s31, 0
    %p523 = por %p521, %p522
    %p524 = scmp.ne.s32.totalorder %s513, %s516
    %p525 = scmp.eq.s32.totalorder %s36, 1
    %p526 = por %p524, %p525
    %p527 = scmp.ne.s32.totalorder %s516, %s517
    %p528 = scmp.eq.s32.totalorder %s36, 0
    %p529 = por %p527, %p528
    %p530 = scmp.ne.s32.totalorder %s516, %s517
    %p531 = scmp.eq.s32.totalorder %s37, 1
    %p532 = por %p530, %p531
    %p534 = scmp.ne.s32.totalorder %s517, %s533
    %p535 = scmp.eq.s32.totalorder %s37, 0
    %p536 = por %p534, %p535
    %p537 = scmp.le.s32.totalorder 1, %s31
    %p538 = scmp.lt.s32.totalorder %s31, 3
    %p539 = pnand %p537, %p538
    %p540 = pneg %p539
    // Predicated region
    $region9: #{segmenter_forward.1} parent=5 // pred_check
      _
    $region10: #{segmenter_forward.1} parent=5 // pred_check_branch
      %542 = sbr.rel (%p539) target = $region12
    $region11: #{segmenter_forward.1} parent=5 // pred_region
      %s543 = ssub.s32 %s31, 1
      // Predicated region
      $region13: #{segmenter_forward.1} parent=11 // pred_check
        %p544 = pneg %p78
      $region14: #{segmenter_forward.1} parent=11 // pred_check_branch
        %546 = sbr.rel (%p544) target = $region16
      $region15: #{segmenter_forward.1} parent=11 // pred_region
        _
      $region16: #{segmenter_forward.1} parent=11 // pred_fallthru
        _
      // Predicated region
      $region17: #{segmenter_forward.1} parent=11 // pred_check
        %p547 = pneg %p99
      $region18: #{segmenter_forward.1} parent=11 // pred_check_branch
        %549 = sbr.rel (%p547) target = $region20
      $region19: #{segmenter_forward.1} parent=11 // pred_region
        _
      $region20: #{segmenter_forward.1} parent=11 // pred_fallthru
        _
      // Predicated region
      $region21: #{segmenter_forward.1} parent=11 // pred_check
        %p550 = pneg %p120
      $region22: #{segmenter_forward.1} parent=11 // pred_check_branch
        %552 = sbr.rel (%p550) target = $region24
      $region23: #{segmenter_forward.1} parent=11 // pred_region
        _
      $region24: #{segmenter_forward.1} parent=11 // pred_fallthru
        _
      // Predicated region
      $region25: #{segmenter_forward.1} parent=11 // pred_check
        %p553 = pneg %p141
      $region26: #{segmenter_forward.1} parent=11 // pred_check_branch
        %555 = sbr.rel (%p553) target = $region28
      $region27: #{segmenter_forward.1} parent=11 // pred_region
        _
      $region28: #{segmenter_forward.1} parent=11 // pred_fallthru
        _
      // Predicated region
      $region29: #{segmenter_forward.1} parent=11 // pred_check
        %p556 = pneg %p162
      $region30: #{segmenter_forward.1} parent=11 // pred_check_branch
        %558 = sbr.rel (%p556) target = $region32
      $region31: #{segmenter_forward.1} parent=11 // pred_region
        _
      $region32: #{segmenter_forward.1} parent=11 // pred_fallthru
        _
      // Predicated region
      $region33: #{segmenter_forward.1} parent=11 // pred_check
        %p559 = pneg %p183
      $region34: #{segmenter_forward.1} parent=11 // pred_check_branch
        %561 = sbr.rel (%p559) target = $region36
      $region35: #{segmenter_forward.1} parent=11 // pred_region
        _
      $region36: #{segmenter_forward.1} parent=11 // pred_fallthru
        _
      // Predicated region
      $region37: #{segmenter_forward.1} parent=11 // pred_check
        %p562 = pneg %p204
      $region38: #{segmenter_forward.1} parent=11 // pred_check_branch
        %564 = sbr.rel (%p562) target = $region40
      $region39: #{segmenter_forward.1} parent=11 // pred_region
        _
      $region40: #{segmenter_forward.1} parent=11 // pred_fallthru
        _
      // Predicated region
      $region41: #{segmenter_forward.1} parent=11 // pred_check
        %p565 = pneg %p225
      $region42: #{segmenter_forward.1} parent=11 // pred_check_branch
        %567 = sbr.rel (%p565) target = $region44
      $region43: #{segmenter_forward.1} parent=11 // pred_region
        _
      $region44: #{segmenter_forward.1} parent=11 // pred_fallthru
        _
      // Predicated region
      $region45: #{segmenter_forward.1} parent=11 // pred_check
        %p568 = pneg %p246
      $region46: #{segmenter_forward.1} parent=11 // pred_check_branch
        %570 = sbr.rel (%p568) target = $region48
      $region47: #{segmenter_forward.1} parent=11 // pred_region
        _
      $region48: #{segmenter_forward.1} parent=11 // pred_fallthru
        _
      // Predicated region
      $region49: #{segmenter_forward.1} parent=11 // pred_check
        %p571 = pneg %p267
      $region50: #{segmenter_forward.1} parent=11 // pred_check_branch
        %573 = sbr.rel (%p571) target = $region52
      $region51: #{segmenter_forward.1} parent=11 // pred_region
        _
      $region52: #{segmenter_forward.1} parent=11 // pred_fallthru
        _
      // Predicated region
      $region53: #{segmenter_forward.1} parent=11 // pred_check
        %p574 = pneg %p288
      $region54: #{segmenter_forward.1} parent=11 // pred_check_branch
        %576 = sbr.rel (%p574) target = $region56
      $region55: #{segmenter_forward.1} parent=11 // pred_region
        _
      $region56: #{segmenter_forward.1} parent=11 // pred_fallthru
        _
      // Predicated region
      $region57: #{segmenter_forward.1} parent=11 // pred_check
        %p577 = pneg %p309
      $region58: #{segmenter_forward.1} parent=11 // pred_check_branch
        %579 = sbr.rel (%p577) target = $region60
      $region59: #{segmenter_forward.1} parent=11 // pred_region
        _
      $region60: #{segmenter_forward.1} parent=11 // pred_fallthru
        _
      // Predicated region
      $region61: #{segmenter_forward.1} parent=11 // pred_check
        %p580 = pneg %p330
      $region62: #{segmenter_forward.1} parent=11 // pred_check_branch
        %582 = sbr.rel (%p580) target = $region64
      $region63: #{segmenter_forward.1} parent=11 // pred_region
        _
      $region64: #{segmenter_forward.1} parent=11 // pred_fallthru
        _
      // Predicated region
      $region65: #{segmenter_forward.1} parent=11 // pred_check
        %p583 = pneg %p351
      $region66: #{segmenter_forward.1} parent=11 // pred_check_branch
        %585 = sbr.rel (%p583) target = $region68
      $region67: #{segmenter_forward.1} parent=11 // pred_region
        _
      $region68: #{segmenter_forward.1} parent=11 // pred_fallthru
        _
      // Predicated region
      $region69: #{segmenter_forward.1} parent=11 // pred_check
        %p586 = pneg %p372
      $region70: #{segmenter_forward.1} parent=11 // pred_check_branch
        %588 = sbr.rel (%p586) target = $region72
      $region71: #{segmenter_forward.1} parent=11 // pred_region
        _
      $region72: #{segmenter_forward.1} parent=11 // pred_fallthru
        _
      // Predicated region
      $region73: #{segmenter_forward.1} parent=11 // pred_check
        %p589 = pneg %p393
      $region74: #{segmenter_forward.1} parent=11 // pred_check_branch
        %591 = sbr.rel (%p589) target = $region76
      $region75: #{segmenter_forward.1} parent=11 // pred_region
        _
      $region76: #{segmenter_forward.1} parent=11 // pred_fallthru
        _
      // Predicated region
      $region77: #{segmenter_forward.1} parent=11 // pred_check
        %p592 = pneg %p414
      $region78: #{segmenter_forward.1} parent=11 // pred_check_branch
        %594 = sbr.rel (%p592) target = $region80
      $region79: #{segmenter_forward.1} parent=11 // pred_region
        _
      $region80: #{segmenter_forward.1} parent=11 // pred_fallthru
        _
      // Predicated region
      $region81: #{segmenter_forward.1} parent=11 // pred_check
        %p595 = pneg %p435
      $region82: #{segmenter_forward.1} parent=11 // pred_check_branch
        %597 = sbr.rel (%p595) target = $region84
      $region83: #{segmenter_forward.1} parent=11 // pred_region
        _
      $region84: #{segmenter_forward.1} parent=11 // pred_fallthru
        _
      // Predicated region
      $region85: #{segmenter_forward.1} parent=11 // pred_check
        %p598 = pneg %p456
      $region86: #{segmenter_forward.1} parent=11 // pred_check_branch
        %600 = sbr.rel (%p598) target = $region88
      $region87: #{segmenter_forward.1} parent=11 // pred_region
        _
      $region88: #{segmenter_forward.1} parent=11 // pred_fallthru
        _
      // Predicated region
      $region89: #{segmenter_forward.1} parent=11 // pred_check
        %p601 = pneg %p477
      $region90: #{segmenter_forward.1} parent=11 // pred_check_branch
        %603 = sbr.rel (%p601) target = $region92
      $region91: #{segmenter_forward.1} parent=11 // pred_region
        _
      $region92: #{segmenter_forward.1} parent=11 // pred_fallthru
        _
    $region12: #{segmenter_forward.1} parent=5 // pred_fallthru
      _
    %p604 = scmp.lt.s32.totalorder %s31, 2
    // Predicated region
    $region93: #{segmenter_forward.1} parent=5 // pred_check
      %p605 = pneg %p604
    $region94: #{segmenter_forward.1} parent=5 // pred_check_branch
      %607 = sbr.rel (%p605) target = $region96
    $region95: #{segmenter_forward.1} parent=5 // pred_region
      // Predicated region
      $region97: #{segmenter_forward.1} parent=95 // pred_check
        %p608 = pneg %p51
      $region98: #{segmenter_forward.1} parent=95 // pred_check_branch
        %610 = sbr.rel (%p608) target = $region100
      $region99: #{segmenter_forward.1} parent=95 // pred_region
        %p611 = scmp.lt.s32.totalorder %s31, 1
        %s612 = scalar_select %p611, %s31, 1
        %s613 = smul.addr %s612, 3
        %s614 = smul.addr %s613, 8
        %s615 = scalar_lea.vmem %s0, %s614
      $region100: #{segmenter_forward.1} parent=95 // pred_fallthru
        _
    $region96: #{segmenter_forward.1} parent=5 // pred_fallthru
      _
    %p616 = scmp.le.s32.totalorder 1, %s31
    %p617 = scmp.lt.s32.totalorder %s31, 3
    %p618 = pnand %p616, %p617
    %p619 = pneg %p618
    // Predicated region
    $region101: #{segmenter_forward.1} parent=5 // pred_check
      _
    $region102: #{segmenter_forward.1} parent=5 // pred_check_branch
      %621 = sbr.rel (%p618) target = $region104
    $region103: #{segmenter_forward.1} parent=5 // pred_region
      %s622 = ssub.s32 %s31, 1
      %p623 = scmp.lt.s32.totalorder %s36, 1
      %s624 = scalar_select %p623, %s36, 1
      %s625 = smul.addr %s624, 3
      %s626 = smul.addr %s625, 8
      %s627 = scalar_lea.vmem %s0, %s626
      %p628 = pneg %p57
      %p629 = pneg %p54
      %p630 = pneg %p78
      %p631 = pneg %p75
      %p632 = pneg %p99
      %p633 = pneg %p96
      %p634 = pneg %p120
      %p635 = pneg %p117
      %p636 = pneg %p141
      %p637 = pneg %p138
      %p638 = pneg %p162
      %p639 = pneg %p159
      %p640 = pneg %p183
      %p641 = pneg %p180
      %p642 = pneg %p204
      %p643 = pneg %p201
      %p644 = pneg %p225
      %p645 = pneg %p222
      %p646 = pneg %p246
      %p647 = pneg %p243
      %p648 = pneg %p267
      %p649 = pneg %p264
      %p650 = pneg %p288
      %p651 = pneg %p285
      %p652 = pneg %p309
      %p653 = pneg %p306
      %p654 = pneg %p330
      %p655 = pneg %p327
      %p656 = pneg %p351
      %p657 = pneg %p348
      %p658 = pneg %p372
      %p659 = pneg %p369
      %p660 = pneg %p393
      %p661 = pneg %p390
      %p662 = pneg %p414
      %p663 = pneg %p411
      %p664 = pneg %p435
      %p665 = pneg %p432
      %p666 = pneg %p456
      %p667 = pneg %p453
      %p668 = pneg %p477
      %p669 = pneg %p474
      %p670 = pneg %p503
      %p671 = pneg %p500
      %p672 = scmp.lt.s32.totalorder %s36, 1
      %s673 = scalar_select %p672, %s36, 1
      %s674 = smul.addr %s673, 2
      %s675 = scalar_lea.vmem %s21, %s674
      %p676 = pneg %p529
      %p677 = pneg %p526
      %p678 = scmp.lt.s32.totalorder %s36, 1
      %s679 = scalar_select %p678, %s36, 1
      %s680 = smul.addr %s679, 2
      %s681 = scalar_lea.vmem %s22, %s680
      %p682 = scmp.lt.s32.totalorder %s36, 1
      %s683 = scalar_select %p682, %s36, 1
      %s684 = smul.addr %s683, 3
      %s685 = smul.addr %s684, 8
      %s686 = scalar_lea.vmem %s0, %s685
      %p687 = scmp.lt.s32.totalorder %s36, 1
      %s688 = scalar_select %p687, %s36, 1
      %s689 = smul.addr %s688, 2
      %s690 = scalar_lea.vmem %s21, %s689
      %p691 = scmp.lt.s32.totalorder %s36, 1
      %s692 = scalar_select %p691, %s36, 1
      %s693 = smul.addr %s692, 2
      %s694 = scalar_lea.vmem %s22, %s693
      %v696 = vld [vmem:[%s686] sm:$0xff]
      %v697 = vld [vmem:[%s686 + $0x8] sm:$0xff]
      %v698 = vld [vmem:[%s686 + $0x10] sm:$0xff]
      %v699 = vld [vmem:[%s1] sm:$0xf]
      %v700 = vld [vmem:[%s1 + $0x4] sm:$0xf]
      %v701 = vld [vmem:[%s1 + $0x8] sm:$0xf]
      %v702 = vld [vmem:[%s1 + $0xc] sm:$0xf]
      %v703 = vld [vmem:[%s1 + $0x10] sm:$0xf]
      %v704 = vld [vmem:[%s1 + $0x14] sm:$0xf]
      %v705 = vpack.c.bf16 %v697, %v696
      %v706 = vpack.c.bf16 %v698, %v698
      %v707 = vld [vmem:[%s2] sm:$0x1]
      %v709 = vlaneseq
      %v710 = vshrl.u32 %v709, 7
      %v711 = vsub.s32 0, %v710
      %v712 = vrot.slane %v707, %v711
      %v720 = vunpack.c.l.b16 %v699
      %v721 = vunpack.c.l.b16 %v700
      %v722 = vunpack.c.l.b16 %v701
      %v723 = vunpack.c.l.b16 %v702
      %v724 = vunpack.c.l.b16 %v703
      %v725 = vunpack.c.l.b16 %v704
      %v726 = vpack.c.b16 %v721, %v720
      %v727 = vpack.c.b16 %v723, %v722
      %v728 = vpack.c.b16 %v725, %v724
      %vm732 = vcmask 392192
      %v734 = vsel %vm732, %v705, 0
      %v737 = vsel %vm732, %v706, 0
      %739 = vmatprep.subr.bf16.mxu0 0
      %740 = vmatpush1.bf16.msra.mxu0 0
      %741 = vmatprep.subr.bf16.mxu0 0
      %742 = vmatpush1.bf16.msra.mxu0 0
      %743 = vmatprep.subr.bf16.mxu0 0
      %744 = vmatpush1.bf16.msra.mxu0 0
      %745 = vmatprep.subr.bf16.mxu0 0
      %746 = vmatpush1.bf16.msra.mxu0 0
      %747 = vmatprep.subr.bf16.mxu0 0
      %748 = vmatpush1.bf16.msra.mxu0 0
      %749 = vmatprep.subr.bf16.mxu0 0
      %750 = vmatpush1.bf16.msra.mxu0 %v728
      %751 = vmatprep.subr.bf16.mxu0 0
      %752 = vmatpush1.bf16.msra.mxu0 %v727
      %753 = vmatprep.subr.bf16.mxu0 0
      %754 = vmatpush1.bf16.msra.mxu0 %v726
      %755 = vmatprep.subr.bf16.mxu0 0
      %756 = vmatpush2.bf16.msra.mxu0 0
      %757 = vmatprep.subr.bf16.mxu0 0
      %758 = vmatpush2.bf16.msra.mxu0 0
      %759 = vmatprep.subr.bf16.mxu0 0
      %760 = vmatpush2.bf16.msra.mxu0 0
      %761 = vmatprep.subr.bf16.mxu0 0
      %762 = vmatpush2.bf16.msra.mxu0 0
      %763 = vmatprep.subr.bf16.mxu0 0
      %764 = vmatpush2.bf16.msra.mxu0 0
      %765 = vmatprep.subr.bf16.mxu0 0
      %766 = vmatpush2.bf16.msra.mxu0 0
      %767 = vmatprep.subr.bf16.mxu0 0
      %768 = vmatpush2.bf16.msra.mxu0 0
      %769 = vmatprep.subr.bf16.mxu0 0
      %770 = vmatpush2.bf16.msra.mxu0 0
      %771 = vmatprep.mubr.bf16.mxu0 0
      %772 = vmatmul.mubr.bf16.gmra.mxu0 %v734
      %v773 = vpop.f32.mrf.mxu0
      %v774 = vadd.f32 %v712, %v773
      %v775 = vpop.f32.mrf.mxu0
      %v776 = vpop.f32.mrf.mxu0
      %v777 = vadd.f32 %v712, %v776
      %v778 = vpop.f32.mrf.mxu0
      %779 = vmatprep.mubr.bf16.mxu0 0
      %780 = vmatmul.mubr.bf16.gmra.mxu0 %v737
      %v781 = vpop.f32.mrf.mxu0
      %v782 = vadd.f32 %v712, %v781
      %v783 = vpop.f32.mrf.mxu0
      %v784 = vpop.f32.mrf.mxu0
      %v785 = vpop.f32.mrf.mxu0
      %786 = vdwg.mxu0
      %v787 = vld [vmem:[%s3] sm:$0xff]
      %v788 = vld [vmem:[%s3 + $0x8] sm:$0xff]
      %v789 = vld [vmem:[%s3 + $0x10] sm:$0xff]
      %v790 = vadd.f32 %v774, %v787
      %v791 = vadd.f32 %v777, %v788
      %v792 = vadd.f32 %v782, %v789
      %vm793 = vcmask 261120
      %v794 = vsel %vm793, %v790, 0.0
      %795 = vadd.xlane.f32.xlu0 %v794
      %v796 = vpop.xlane.xlu0 %795
      %v797 = vsel %vm793, %v791, 0.0
      %798 = vadd.xlane.f32.xlu0 %v797
      %v799 = vpop.xlane.xlu0 %798
      %v800 = vsel %vm793, %v792, 0.0
      %801 = vadd.xlane.f32.xlu0 %v800
      %v802 = vpop.xlane.xlu0 %801
      %v803 = vrcp.pop 32.0
      %v804 = vmul.f32 %v796, %v803
      %v805 = vmul.f32 %v799, %v803
      %v806 = vmul.f32 %v802, %v803
      %v807 = vsub.f32 %v790, %v804
      %v808 = vsub.f32 %v791, %v805
      %v809 = vsub.f32 %v792, %v806
      %v810 = vmul.f32 %v807, %v807
      %v811 = vmul.f32 %v808, %v808
      %v812 = vmul.f32 %v809, %v809
      %v813 = vsel %vm793, %v810, 0.0
      %814 = vadd.xlane.f32.xlu0 %v813
      %v815 = vpop.xlane.xlu0 %814
      %v816 = vsel %vm793, %v811, 0.0
      %817 = vadd.xlane.f32.xlu0 %v816
      %v818 = vpop.xlane.xlu0 %817
      %v819 = vsel %vm793, %v812, 0.0
      %820 = vadd.xlane.f32.xlu0 %v819
      %v821 = vpop.xlane.xlu0 %820
      %v822 = vmul.f32 %v815, %v803
      %v823 = vmul.f32 %v818, %v803
      %v824 = vmul.f32 %v821, %v803
      %v825 = vadd.f32 %v822, 1e-05
      %v826 = vadd.f32 %v823, 1e-05
      %v827 = vadd.f32 %v824, 1e-05
      %v828 = vrsqrt.pop %v825
      %v829 = vrsqrt.pop %v826
      %v830 = vrsqrt.pop %v827
      %v831 = vmul.f32 %v807, %v828
      %v832 = vmul.f32 %v808, %v829
      %v833 = vmul.f32 %v809, %v830
      %v834 = vld [vmem:[%s4] sm:$0x1]
      %v836 = vlaneseq
      %v837 = vshrl.u32 %v836, 7
      %v838 = vsub.s32 0, %v837
      %v839 = vrot.slane %v834, %v838
      %v841 = vmul.f32 %v831, %v839
      %v842 = vmul.f32 %v832, %v839
      %v843 = vmul.f32 %v833, %v839
      %v844 = vld [vmem:[%s5] sm:$0x1]
      %v846 = vlaneseq
      %v847 = vshrl.u32 %v846, 7
      %v848 = vsub.s32 0, %v847
      %v849 = vrot.slane %v844, %v848
      %v851 = vadd.f32 %v841, %v849
      %v852 = vadd.f32 %v842, %v849
      %v853 = vadd.f32 %v843, %v849
      %v854 = vld [vmem:[%s6] sm:$0xf]
      %v855 = vld [vmem:[%s6 + $0x4] sm:$0xf]
      %v856 = vld [vmem:[%s6 + $0x8] sm:$0xf]
      %v857 = vld [vmem:[%s6 + $0xc] sm:$0xf]
      %v858 = vpack.c.bf16 %v852, %v851
      %v859 = vpack.c.bf16 %v853, %v853
      %v860 = vld [vmem:[%s7] sm:$0x1]
      %v862 = vlaneseq
      %v863 = vshrl.u32 %v862, 7
      %v864 = vsub.s32 0, %v863
      %v865 = vrot.slane %v860, %v864
      %v871 = vunpack.c.l.b16 %v854
      %v872 = vunpack.c.l.b16 %v855
      %v873 = vunpack.c.l.b16 %v856
      %v874 = vunpack.c.l.b16 %v857
      %v875 = vpack.c.b16 %v872, %v871
      %v876 = vpack.c.b16 %v874, %v873
      %v880 = vsel %vm793, %v858, 0
      %v883 = vsel %vm793, %v859, 0
      %885 = vmatprep.subr.bf16.mxu0 0
      %886 = vmatpush1.bf16.msra.mxu0 0
      %887 = vmatprep.subr.bf16.mxu0 0
      %888 = vmatpush1.bf16.msra.mxu0 0
      %889 = vmatprep.subr.bf16.mxu0 0
      %890 = vmatpush1.bf16.msra.mxu0 0
      %891 = vmatprep.subr.bf16.mxu0 0
      %892 = vmatpush1.bf16.msra.mxu0 0
      %893 = vmatprep.subr.bf16.mxu0 0
      %894 = vmatpush1.bf16.msra.mxu0 0
      %895 = vmatprep.subr.bf16.mxu0 0
      %896 = vmatpush1.bf16.msra.mxu0 0
      %897 = vmatprep.subr.bf16.mxu0 0
      %898 = vmatpush1.bf16.msra.mxu0 %v876
      %899 = vmatprep.subr.bf16.mxu0 0
      %900 = vmatpush1.bf16.msra.mxu0 %v875
      %901 = vmatprep.subr.bf16.mxu0 0
      %902 = vmatpush2.bf16.msra.mxu0 0
      %903 = vmatprep.subr.bf16.mxu0 0
      %904 = vmatpush2.bf16.msra.mxu0 0
      %905 = vmatprep.subr.bf16.mxu0 0
      %906 = vmatpush2.bf16.msra.mxu0 0
      %907 = vmatprep.subr.bf16.mxu0 0
      %908 = vmatpush2.bf16.msra.mxu0 0
      %909 = vmatprep.subr.bf16.mxu0 0
      %910 = vmatpush2.bf16.msra.mxu0 0
      %911 = vmatprep.subr.bf16.mxu0 0
      %912 = vmatpush2.bf16.msra.mxu0 0
      %913 = vmatprep.subr.bf16.mxu0 0
      %914 = vmatpush2.bf16.msra.mxu0 0
      %915 = vmatprep.subr.bf16.mxu0 0
      %916 = vmatpush2.bf16.msra.mxu0 0
      %917 = vmatprep.mubr.bf16.mxu0 0
      %918 = vmatmul.mubr.bf16.gmra.mxu0 %v880
      %v919 = vpop.f32.mrf.mxu0
      %v920 = vadd.f32 %v865, %v919
      %v921 = vpop.f32.mrf.mxu0
      %v922 = vpop.f32.mrf.mxu0
      %v923 = vadd.f32 %v865, %v922
      %v924 = vpop.f32.mrf.mxu0
      %925 = vmatprep.mubr.bf16.mxu0 0
      %926 = vmatmul.mubr.bf16.gmra.mxu0 %v883
      %v927 = vpop.f32.mrf.mxu0
      %v928 = vadd.f32 %v865, %v927
      %v929 = vpop.f32.mrf.mxu0
      %v930 = vpop.f32.mrf.mxu0
      %v931 = vpop.f32.mrf.mxu0
      %932 = vdwg.mxu0
      %v933 = vlaneseq
      %v934 = vand.u32 %v933, 127
      %vm935 = vcmp.lt.s32.totalorder %v934, 17
      %939 = vrot.lane.b32.xlu0 %v920, 96
      %v940 = vpop.permute.xlu0 %939
      %941 = vrot.lane.b32.xlu0 %v923, 96
      %v942 = vpop.permute.xlu0 %941
      %943 = vrot.lane.b32.xlu0 %v928, 96
      %v944 = vpop.permute.xlu0 %943
      %948 = vxpose.xlu0.b32.start [1/16] %v940, 128
      %949 = vxpose.xlu0.b32.cont [2/16] %v942, 128
      %950 = vxpose.xlu0.b32.cont [3/16] %v944, 128
      %951 = vxpose.xlu0.b32.cont [4/16] 0.0, 128
      %952 = vxpose.xlu0.b32.cont [5/16] 0.0, 128
      %953 = vxpose.xlu0.b32.cont [6/16] 0.0, 128
      %954 = vxpose.xlu0.b32.cont [7/16] 0.0, 128
      %955 = vxpose.xlu0.b32.cont [8/16] 0.0, 128
      %956 = vxpose.xlu0.b32.cont [9/16] 0.0, 128
      %957 = vxpose.xlu0.b32.cont [10/16] 0.0, 128
      %958 = vxpose.xlu0.b32.cont [11/16] 0.0, 128
      %959 = vxpose.xlu0.b32.cont [12/16] 0.0, 128
      %960 = vxpose.xlu0.b32.cont [13/16] 0.0, 128
      %961 = vxpose.xlu0.b32.cont [14/16] 0.0, 128
      %962 = vxpose.xlu0.b32.cont [15/16] 0.0, 128
      %963 = vxpose.xlu0.b32.end [16/16] 0.0, 128
      %v964 = vpop.trf.xlu0
      %v965 = vpop.trf.xlu0
      %v966 = vpop.trf.xlu0
      %v967 = vpop.trf.xlu0
      %v968 = vpop.trf.xlu0
      %v969 = vpop.trf.xlu0
      %v970 = vpop.trf.xlu0
      %v971 = vpop.trf.xlu0
      %v972 = vpop.trf.xlu0
      %v973 = vpop.trf.xlu0
      %v974 = vpop.trf.xlu0
      %v975 = vpop.trf.xlu0
      %v976 = vpop.trf.xlu0
      %v977 = vpop.trf.xlu0
      %v978 = vpop.trf.xlu0
      %v979 = vpop.trf.xlu0
      %v980 = vpack.c.bf16 %v923, %v920
      %v981 = vpack.c.bf16 %v928, %v928
      %v982 = vpack.c.bf16 %v964, %v964
      %vm983 = vcmask 64512
      %v985 = vsel %vm983, %v980, 0
      %v988 = vsel %vm983, %v981, 0
      %vm990 = vcmask 1043456
      %v992 = vsel %vm990, %v982, 0
      %994 = vmatprep.subr.bf16.mxu0 0
      %995 = vmatpush1.bf16.msra.mxu0 0
      %996 = vmatprep.subr.bf16.mxu0 0
      %997 = vmatpush1.bf16.msra.mxu0 0
      %998 = vmatprep.subr.bf16.mxu0 0
      %999 = vmatpush1.bf16.msra.mxu0 0
      %1000 = vmatprep.subr.bf16.mxu0 0
      %1001 = vmatpush1.bf16.msra.mxu0 0
      %1002 = vmatprep.subr.bf16.mxu0 0
      %1003 = vmatpush1.bf16.msra.mxu0 0
      %1004 = vmatprep.subr.bf16.mxu0 0
      %1005 = vmatpush1.bf16.msra.mxu0 0
      %1006 = vmatprep.subr.bf16.mxu0 0
      %1007 = vmatpush1.bf16.msra.mxu0 0
      %1008 = vmatprep.subr.bf16.mxu0 0
      %1009 = vmatpush1.bf16.msra.mxu0 %v992
      %1010 = vmatprep.subr.bf16.mxu0 0
      %1011 = vmatpush2.bf16.msra.mxu0 0
      %1012 = vmatprep.subr.bf16.mxu0 0
      %1013 = vmatpush2.bf16.msra.mxu0 0
      %1014 = vmatprep.subr.bf16.mxu0 0
      %1015 = vmatpush2.bf16.msra.mxu0 0
      %1016 = vmatprep.subr.bf16.mxu0 0
      %1017 = vmatpush2.bf16.msra.mxu0 0
      %1018 = vmatprep.subr.bf16.mxu0 0
      %1019 = vmatpush2.bf16.msra.mxu0 0
      %1020 = vmatprep.subr.bf16.mxu0 0
      %1021 = vmatpush2.bf16.msra.mxu0 0
      %1022 = vmatprep.subr.bf16.mxu0 0
      %1023 = vmatpush2.bf16.msra.mxu0 0
      %1024 = vmatprep.subr.bf16.mxu0 0
      %1025 = vmatpush2.bf16.msra.mxu0 0
      %1026 = vmatprep.mubr.bf16.mxu0 0
      %1027 = vmatmul.mubr.bf16.gmra.mxu0 %v985
      %v1028 = vpop.f32.mrf.mxu0
      %v1029 = vadd.f32 0.0, %v1028
      %v1030 = vpop.f32.mrf.mxu0
      %v1031 = vpop.f32.mrf.mxu0
      %v1032 = vadd.f32 0.0, %v1031
      %v1033 = vpop.f32.mrf.mxu0
      %1034 = vmatprep.mubr.bf16.mxu0 0
      %1035 = vmatmul.mubr.bf16.gmra.mxu0 %v988
      %v1036 = vpop.f32.mrf.mxu0
      %v1037 = vadd.f32 0.0, %v1036
      %v1038 = vpop.f32.mrf.mxu0
      %v1039 = vpop.f32.mrf.mxu0
      %v1040 = vpop.f32.mrf.mxu0
      %1041 = vdwg.mxu0
      %v1042 = vmul.f32 %v1029, 0.35355338
      %v1043 = vmul.f32 %v1032, 0.35355338
      %v1044 = vmul.f32 %v1037, 0.35355338
      %v1045 = vsel %vm935, %v1042, -1e+30
      %v1046 = vsel %vm935, %v1043, -1e+30
      %v1047 = vsel %vm935, %v1044, -1e+30
      %vm1048 = vcmask 195584
      %v1049 = vsel %vm1048, %v1045, -inf
      %1050 = vmax.xlane.f32.xlu0 %v1049
      %v1051 = vpop.xlane.xlu0 %1050
      %v1052 = vsel %vm1048, %v1046, -inf
      %1053 = vmax.xlane.f32.xlu0 %v1052
      %v1054 = vpop.xlane.xlu0 %1053
      %v1055 = vsel %vm1048, %v1047, -inf
      %1056 = vmax.xlane.f32.xlu0 %v1055
      %v1057 = vpop.xlane.xlu0 %1056
      %v1058 = vsub.f32 %v1045, %v1051
      %v1059 = vsub.f32 %v1046, %v1054
      %v1060 = vsub.f32 %v1047, %v1057
      %v1061 = vmul.f32 %v1058, 1.442695
      %v1062 = vpow.pop %v1061
      %v1063 = vmul.f32 %v1059, 1.442695
      %v1064 = vpow.pop %v1063
      %v1065 = vmul.f32 %v1060, 1.442695
      %v1066 = vpow.pop %v1065
      %v1067 = vsel %vm1048, %v1062, 0.0
      %1068 = vadd.xlane.f32.xlu0 %v1067
      %v1069 = vpop.xlane.xlu0 %1068
      %v1070 = vsel %vm1048, %v1064, 0.0
      %1071 = vadd.xlane.f32.xlu0 %v1070
      %v1072 = vpop.xlane.xlu0 %1071
      %v1073 = vsel %vm1048, %v1066, 0.0
      %1074 = vadd.xlane.f32.xlu0 %v1073
      %v1075 = vpop.xlane.xlu0 %1074
      %v1076 = vrcp.pop %v1069
      %v1077 = vrcp.pop %v1072
      %v1078 = vrcp.pop %v1075
      %v1079 = vmul.f32 %v1062, %v1076
      %v1080 = vmul.f32 %v1064, %v1077
      %v1081 = vmul.f32 %v1066, %v1078
      %v1082 = vpack.c.bf16 %v1080, %v1079
      %v1083 = vpack.c.bf16 %v1081, %v1081
      %1086 = vrot.lane.b32.xlu0 %v980, 64
      %v1087 = vpop.permute.xlu0 %1086
      %1088 = vrot.lane.b32.xlu0 %v981, 64
      %v1089 = vpop.permute.xlu0 %1088
      %v1092 = vsel %vm1048, %v1082, 0
      %v1095 = vsel %vm1048, %v1083, 0
      %v1098 = vsel %vm990, %v1089, 0
      %1100 = vmatprep.subr.bf16.mxu0 0
      %1101 = vmatpush1.bf16.msra.mxu0 0
      %1102 = vmatprep.subr.bf16.mxu0 0
      %1103 = vmatpush1.bf16.msra.mxu0 0
      %1104 = vmatprep.subr.bf16.mxu0 0
      %1105 = vmatpush1.bf16.msra.mxu0 0
      %1106 = vmatprep.subr.bf16.mxu0 0
      %1107 = vmatpush1.bf16.msra.mxu0 0
      %1108 = vmatprep.subr.bf16.mxu0 0
      %1109 = vmatpush1.bf16.msra.mxu0 0
      %1110 = vmatprep.subr.bf16.mxu0 0
      %1111 = vmatpush1.bf16.msra.mxu0 0
      %1112 = vmatprep.subr.bf16.mxu0 0
      %1113 = vmatpush1.bf16.msra.mxu0 %v1098
      %1114 = vmatprep.subr.bf16.mxu0 0
      %1115 = vmatpush1.bf16.msra.mxu0 %v1087
      %1116 = vmatprep.subr.bf16.mxu0 0
      %1117 = vmatpush2.bf16.msra.mxu0 0
      %1118 = vmatprep.subr.bf16.mxu0 0
      %1119 = vmatpush2.bf16.msra.mxu0 0
      %1120 = vmatprep.subr.bf16.mxu0 0
      %1121 = vmatpush2.bf16.msra.mxu0 0
      %1122 = vmatprep.subr.bf16.mxu0 0
      %1123 = vmatpush2.bf16.msra.mxu0 0
      %1124 = vmatprep.subr.bf16.mxu0 0
      %1125 = vmatpush2.bf16.msra.mxu0 0
      %1126 = vmatprep.subr.bf16.mxu0 0
      %1127 = vmatpush2.bf16.msra.mxu0 0
      %1128 = vmatprep.subr.bf16.mxu0 0
      %1129 = vmatpush2.bf16.msra.mxu0 0
      %1130 = vmatprep.subr.bf16.mxu0 0
      %1131 = vmatpush2.bf16.msra.mxu0 0
      %1132 = vmatprep.mubr.bf16.mxu0 0
      %1133 = vmatmul.mubr.bf16.gmra.mxu0 %v1092
      %v1134 = vpop.f32.mrf.mxu0
      %v1135 = vadd.f32 0.0, %v1134
      %v1136 = vpop.f32.mrf.mxu0
      %v1137 = vpop.f32.mrf.mxu0
      %v1138 = vadd.f32 0.0, %v1137
      %v1139 = vpop.f32.mrf.mxu0
      %1140 = vmatprep.mubr.bf16.mxu0 0
      %1141 = vmatmul.mubr.bf16.gmra.mxu0 %v1095
      %v1142 = vpop.f32.mrf.mxu0
      %v1143 = vadd.f32 0.0, %v1142
      %v1144 = vpop.f32.mrf.mxu0
      %v1145 = vpop.f32.mrf.mxu0
      %v1146 = vpop.f32.mrf.mxu0
      %1147 = vdwg.mxu0
      %1148 = vrot.lane.b32.xlu0 %v920, 88
      %v1149 = vpop.permute.xlu0 %1148
      %1150 = vrot.lane.b32.xlu0 %v923, 88
      %v1151 = vpop.permute.xlu0 %1150
      %1152 = vrot.lane.b32.xlu0 %v928, 88
      %v1153 = vpop.permute.xlu0 %1152
      %1157 = vxpose.xlu0.b32.start [1/16] %v1149, 128
      %1158 = vxpose.xlu0.b32.cont [2/16] %v1151, 128
      %1159 = vxpose.xlu0.b32.cont [3/16] %v1153, 128
      %1160 = vxpose.xlu0.b32.cont [4/16] 0.0, 128
      %1161 = vxpose.xlu0.b32.cont [5/16] 0.0, 128
      %1162 = vxpose.xlu0.b32.cont [6/16] 0.0, 128
      %1163 = vxpose.xlu0.b32.cont [7/16] 0.0, 128
      %1164 = vxpose.xlu0.b32.cont [8/16] 0.0, 128
      %1165 = vxpose.xlu0.b32.cont [9/16] 0.0, 128
      %1166 = vxpose.xlu0.b32.cont [10/16] 0.0, 128
      %1167 = vxpose.xlu0.b32.cont [11/16] 0.0, 128
      %1168 = vxpose.xlu0.b32.cont [12/16] 0.0, 128
      %1169 = vxpose.xlu0.b32.cont [13/16] 0.0, 128
      %1170 = vxpose.xlu0.b32.cont [14/16] 0.0, 128
      %1171 = vxpose.xlu0.b32.cont [15/16] 0.0, 128
      %1172 = vxpose.xlu0.b32.end [16/16] 0.0, 128
      %v1173 = vpop.trf.xlu0
      %v1174 = vpop.trf.xlu0
      %v1175 = vpop.trf.xlu0
      %v1176 = vpop.trf.xlu0
      %v1177 = vpop.trf.xlu0
      %v1178 = vpop.trf.xlu0
      %v1179 = vpop.trf.xlu0
      %v1180 = vpop.trf.xlu0
      %v1181 = vpop.trf.xlu0
      %v1182 = vpop.trf.xlu0
      %v1183 = vpop.trf.xlu0
      %v1184 = vpop.trf.xlu0
      %v1185 = vpop.trf.xlu0
      %v1186 = vpop.trf.xlu0
      %v1187 = vpop.trf.xlu0
      %v1188 = vpop.trf.xlu0
      %v1189 = vpack.c.bf16 %v1173, %v1173
      %1190 = vrot.lane.b32.xlu0 %v980, 120
      %v1191 = vpop.permute.xlu0 %1190
      %1192 = vrot.lane.b32.xlu0 %v981, 120
      %v1193 = vpop.permute.xlu0 %1192
      %v1195 = vsel %vm983, %v1191, 0
      %v1198 = vsel %vm983, %v1193, 0
      %v1201 = vsel %vm990, %v1189, 0
      %1203 = vmatprep.subr.bf16.mxu0 0
      %1204 = vmatpush1.bf16.msra.mxu0 0
      %1205 = vmatprep.subr.bf16.mxu0 0
      %1206 = vmatpush1.bf16.msra.mxu0 0
      %1207 = vmatprep.subr.bf16.mxu0 0
      %1208 = vmatpush1.bf16.msra.mxu0 0
      %1209 = vmatprep.subr.bf16.mxu0 0
      %1210 = vmatpush1.bf16.msra.mxu0 0
      %1211 = vmatprep.subr.bf16.mxu0 0
      %1212 = vmatpush1.bf16.msra.mxu0 0
      %1213 = vmatprep.subr.bf16.mxu0 0
      %1214 = vmatpush1.bf16.msra.mxu0 0
      %1215 = vmatprep.subr.bf16.mxu0 0
      %1216 = vmatpush1.bf16.msra.mxu0 0
      %1217 = vmatprep.subr.bf16.mxu0 0
      %1218 = vmatpush1.bf16.msra.mxu0 %v1201
      %1219 = vmatprep.subr.bf16.mxu0 0
      %1220 = vmatpush2.bf16.msra.mxu0 0
      %1221 = vmatprep.subr.bf16.mxu0 0
      %1222 = vmatpush2.bf16.msra.mxu0 0
      %1223 = vmatprep.subr.bf16.mxu0 0
      %1224 = vmatpush2.bf16.msra.mxu0 0
      %1225 = vmatprep.subr.bf16.mxu0 0
      %1226 = vmatpush2.bf16.msra.mxu0 0
      %1227 = vmatprep.subr.bf16.mxu0 0
      %1228 = vmatpush2.bf16.msra.mxu0 0
      %1229 = vmatprep.subr.bf16.mxu0 0
      %1230 = vmatpush2.bf16.msra.mxu0 0
      %1231 = vmatprep.subr.bf16.mxu0 0
      %1232 = vmatpush2.bf16.msra.mxu0 0
      %1233 = vmatprep.subr.bf16.mxu0 0
      %1234 = vmatpush2.bf16.msra.mxu0 0
      %1235 = vmatprep.mubr.bf16.mxu0 0
      %1236 = vmatmul.mubr.bf16.gmra.mxu0 %v1195
      %v1237 = vpop.f32.mrf.mxu0
      %v1238 = vadd.f32 0.0, %v1237
      %v1239 = vpop.f32.mrf.mxu0
      %v1240 = vpop.f32.mrf.mxu0
      %v1241 = vadd.f32 0.0, %v1240
      %v1242 = vpop.f32.mrf.mxu0
      %1243 = vmatprep.mubr.bf16.mxu0 0
      %1244 = vmatmul.mubr.bf16.gmra.mxu0 %v1198
      %v1245 = vpop.f32.mrf.mxu0
      %v1246 = vadd.f32 0.0, %v1245
      %v1247 = vpop.f32.mrf.mxu0
      %v1248 = vpop.f32.mrf.mxu0
      %v1249 = vpop.f32.mrf.mxu0
      %1250 = vdwg.mxu0
      %v1251 = vmul.f32 %v1238, 0.35355338
      %v1252 = vmul.f32 %v1241, 0.35355338
      %v1253 = vmul.f32 %v1246, 0.35355338
      %v1254 = vsel %vm935, %v1251, -1e+30
      %v1255 = vsel %vm935, %v1252, -1e+30
      %v1256 = vsel %vm935, %v1253, -1e+30
      %v1257 = vsel %vm1048, %v1254, -inf
      %1258 = vmax.xlane.f32.xlu0 %v1257
      %v1259 = vpop.xlane.xlu0 %1258
      %v1260 = vsel %vm1048, %v1255, -inf
      %1261 = vmax.xlane.f32.xlu0 %v1260
      %v1262 = vpop.xlane.xlu0 %1261
      %v1263 = vsel %vm1048, %v1256, -inf
      %1264 = vmax.xlane.f32.xlu0 %v1263
      %v1265 = vpop.xlane.xlu0 %1264
      %v1266 = vsub.f32 %v1254, %v1259
      %v1267 = vsub.f32 %v1255, %v1262
      %v1268 = vsub.f32 %v1256, %v1265
      %v1269 = vmul.f32 %v1266, 1.442695
      %v1270 = vpow.pop %v1269
      %v1271 = vmul.f32 %v1267, 1.442695
      %v1272 = vpow.pop %v1271
      %v1273 = vmul.f32 %v1268, 1.442695
      %v1274 = vpow.pop %v1273
      %v1275 = vsel %vm1048, %v1270, 0.0
      %1276 = vadd.xlane.f32.xlu0 %v1275
      %v1277 = vpop.xlane.xlu0 %1276
      %v1278 = vsel %vm1048, %v1272, 0.0
      %1279 = vadd.xlane.f32.xlu0 %v1278
      %v1280 = vpop.xlane.xlu0 %1279
      %v1281 = vsel %vm1048, %v1274, 0.0
      %1282 = vadd.xlane.f32.xlu0 %v1281
      %v1283 = vpop.xlane.xlu0 %1282
      %v1284 = vrcp.pop %v1277
      %v1285 = vrcp.pop %v1280
      %v1286 = vrcp.pop %v1283
      %v1287 = vmul.f32 %v1270, %v1284
      %v1288 = vmul.f32 %v1272, %v1285
      %v1289 = vmul.f32 %v1274, %v1286
      %v1290 = vpack.c.bf16 %v1288, %v1287
      %v1291 = vpack.c.bf16 %v1289, %v1289
      %1292 = vrot.lane.b32.xlu0 %v980, 56
      %v1293 = vpop.permute.xlu0 %1292
      %1294 = vrot.lane.b32.xlu0 %v981, 56
      %v1295 = vpop.permute.xlu0 %1294
      %v1298 = vsel %vm1048, %v1290, 0
      %v1301 = vsel %vm1048, %v1291, 0
      %v1304 = vsel %vm990, %v1295, 0
      %1306 = vmatprep.subr.bf16.mxu0 0
      %1307 = vmatpush1.bf16.msra.mxu0 0
      %1308 = vmatprep.subr.bf16.mxu0 0
      %1309 = vmatpush1.bf16.msra.mxu0 0
      %1310 = vmatprep.subr.bf16.mxu0 0
      %1311 = vmatpush1.bf16.msra.mxu0 0
      %1312 = vmatprep.subr.bf16.mxu0 0
      %1313 = vmatpush1.bf16.msra.mxu0 0
      %1314 = vmatprep.subr.bf16.mxu0 0
      %1315 = vmatpush1.bf16.msra.mxu0 0
      %1316 = vmatprep.subr.bf16.mxu0 0
      %1317 = vmatpush1.bf16.msra.mxu0 0
      %1318 = vmatprep.subr.bf16.mxu0 0
      %1319 = vmatpush1.bf16.msra.mxu0 %v1304
      %1320 = vmatprep.subr.bf16.mxu0 0
      %1321 = vmatpush1.bf16.msra.mxu0 %v1293
      %1322 = vmatprep.subr.bf16.mxu0 0
      %1323 = vmatpush2.bf16.msra.mxu0 0
      %1324 = vmatprep.subr.bf16.mxu0 0
      %1325 = vmatpush2.bf16.msra.mxu0 0
      %1326 = vmatprep.subr.bf16.mxu0 0
      %1327 = vmatpush2.bf16.msra.mxu0 0
      %1328 = vmatprep.subr.bf16.mxu0 0
      %1329 = vmatpush2.bf16.msra.mxu0 0
      %1330 = vmatprep.subr.bf16.mxu0 0
      %1331 = vmatpush2.bf16.msra.mxu0 0
      %1332 = vmatprep.subr.bf16.mxu0 0
      %1333 = vmatpush2.bf16.msra.mxu0 0
      %1334 = vmatprep.subr.bf16.mxu0 0
      %1335 = vmatpush2.bf16.msra.mxu0 0
      %1336 = vmatprep.subr.bf16.mxu0 0
      %1337 = vmatpush2.bf16.msra.mxu0 0
      %1338 = vmatprep.mubr.bf16.mxu0 0
      %1339 = vmatmul.mubr.bf16.gmra.mxu0 %v1298
      %v1340 = vpop.f32.mrf.mxu0
      %v1341 = vadd.f32 0.0, %v1340
      %v1342 = vpop.f32.mrf.mxu0
      %v1343 = vpop.f32.mrf.mxu0
      %v1344 = vadd.f32 0.0, %v1343
      %v1345 = vpop.f32.mrf.mxu0
      %1346 = vmatprep.mubr.bf16.mxu0 0
      %1347 = vmatmul.mubr.bf16.gmra.mxu0 %v1301
      %v1348 = vpop.f32.mrf.mxu0
      %v1349 = vadd.f32 0.0, %v1348
      %v1350 = vpop.f32.mrf.mxu0
      %v1351 = vpop.f32.mrf.mxu0
      %v1352 = vpop.f32.mrf.mxu0
      %1353 = vdwg.mxu0
      %1354 = vrot.lane.b32.xlu0 %v920, 80
      %v1355 = vpop.permute.xlu0 %1354
      %1356 = vrot.lane.b32.xlu0 %v923, 80
      %v1357 = vpop.permute.xlu0 %1356
      %1358 = vrot.lane.b32.xlu0 %v928, 80
      %v1359 = vpop.permute.xlu0 %1358
      %1363 = vxpose.xlu0.b32.start [1/16] %v1355, 128
      %1364 = vxpose.xlu0.b32.cont [2/16] %v1357, 128
      %1365 = vxpose.xlu0.b32.cont [3/16] %v1359, 128
      %1366 = vxpose.xlu0.b32.cont [4/16] 0.0, 128
      %1367 = vxpose.xlu0.b32.cont [5/16] 0.0, 128
      %1368 = vxpose.xlu0.b32.cont [6/16] 0.0, 128
      %1369 = vxpose.xlu0.b32.cont [7/16] 0.0, 128
      %1370 = vxpose.xlu0.b32.cont [8/16] 0.0, 128
      %1371 = vxpose.xlu0.b32.cont [9/16] 0.0, 128
      %1372 = vxpose.xlu0.b32.cont [10/16] 0.0, 128
      %1373 = vxpose.xlu0.b32.cont [11/16] 0.0, 128
      %1374 = vxpose.xlu0.b32.cont [12/16] 0.0, 128
      %1375 = vxpose.xlu0.b32.cont [13/16] 0.0, 128
      %1376 = vxpose.xlu0.b32.cont [14/16] 0.0, 128
      %1377 = vxpose.xlu0.b32.cont [15/16] 0.0, 128
      %1378 = vxpose.xlu0.b32.end [16/16] 0.0, 128
      %v1379 = vpop.trf.xlu0
      %v1380 = vpop.trf.xlu0
      %v1381 = vpop.trf.xlu0
      %v1382 = vpop.trf.xlu0
      %v1383 = vpop.trf.xlu0
      %v1384 = vpop.trf.xlu0
      %v1385 = vpop.trf.xlu0
      %v1386 = vpop.trf.xlu0
      %v1387 = vpop.trf.xlu0
      %v1388 = vpop.trf.xlu0
      %v1389 = vpop.trf.xlu0
      %v1390 = vpop.trf.xlu0
      %v1391 = vpop.trf.xlu0
      %v1392 = vpop.trf.xlu0
      %v1393 = vpop.trf.xlu0
      %v1394 = vpop.trf.xlu0
      %v1395 = vpack.c.bf16 %v1379, %v1379
      %1396 = vrot.lane.b32.xlu0 %v980, 112
      %v1397 = vpop.permute.xlu0 %1396
      %1398 = vrot.lane.b32.xlu0 %v981, 112
      %v1399 = vpop.permute.xlu0 %1398
      %v1401 = vsel %vm983, %v1397, 0
      %v1404 = vsel %vm983, %v1399, 0
      %v1407 = vsel %vm990, %v1395, 0
      %1409 = vmatprep.subr.bf16.mxu0 0
      %1410 = vmatpush1.bf16.msra.mxu0 0
      %1411 = vmatprep.subr.bf16.mxu0 0
      %1412 = vmatpush1.bf16.msra.mxu0 0
      %1413 = vmatprep.subr.bf16.mxu0 0
      %1414 = vmatpush1.bf16.msra.mxu0 0
      %1415 = vmatprep.subr.bf16.mxu0 0
      %1416 = vmatpush1.bf16.msra.mxu0 0
      %1417 = vmatprep.subr.bf16.mxu0 0
      %1418 = vmatpush1.bf16.msra.mxu0 0
      %1419 = vmatprep.subr.bf16.mxu0 0
      %1420 = vmatpush1.bf16.msra.mxu0 0
      %1421 = vmatprep.subr.bf16.mxu0 0
      %1422 = vmatpush1.bf16.msra.mxu0 0
      %1423 = vmatprep.subr.bf16.mxu0 0
      %1424 = vmatpush1.bf16.msra.mxu0 %v1407
      %1425 = vmatprep.subr.bf16.mxu0 0
      %1426 = vmatpush2.bf16.msra.mxu0 0
      %1427 = vmatprep.subr.bf16.mxu0 0
      %1428 = vmatpush2.bf16.msra.mxu0 0
      %1429 = vmatprep.subr.bf16.mxu0 0
      %1430 = vmatpush2.bf16.msra.mxu0 0
      %1431 = vmatprep.subr.bf16.mxu0 0
      %1432 = vmatpush2.bf16.msra.mxu0 0
      %1433 = vmatprep.subr.bf16.mxu0 0
      %1434 = vmatpush2.bf16.msra.mxu0 0
      %1435 = vmatprep.subr.bf16.mxu0 0
      %1436 = vmatpush2.bf16.msra.mxu0 0
      %1437 = vmatprep.subr.bf16.mxu0 0
      %1438 = vmatpush2.bf16.msra.mxu0 0
      %1439 = vmatprep.subr.bf16.mxu0 0
      %1440 = vmatpush2.bf16.msra.mxu0 0
      %1441 = vmatprep.mubr.bf16.mxu0 0
      %1442 = vmatmul.mubr.bf16.gmra.mxu0 %v1401
      %v1443 = vpop.f32.mrf.mxu0
      %v1444 = vadd.f32 0.0, %v1443
      %v1445 = vpop.f32.mrf.mxu0
      %v1446 = vpop.f32.mrf.mxu0
      %v1447 = vadd.f32 0.0, %v1446
      %v1448 = vpop.f32.mrf.mxu0
      %1449 = vmatprep.mubr.bf16.mxu0 0
      %1450 = vmatmul.mubr.bf16.gmra.mxu0 %v1404
      %v1451 = vpop.f32.mrf.mxu0
      %v1452 = vadd.f32 0.0, %v1451
      %v1453 = vpop.f32.mrf.mxu0
      %v1454 = vpop.f32.mrf.mxu0
      %v1455 = vpop.f32.mrf.mxu0
      %1456 = vdwg.mxu0
      %v1457 = vmul.f32 %v1444, 0.35355338
      %v1458 = vmul.f32 %v1447, 0.35355338
      %v1459 = vmul.f32 %v1452, 0.35355338
      %v1460 = vsel %vm935, %v1457, -1e+30
      %v1461 = vsel %vm935, %v1458, -1e+30
      %v1462 = vsel %vm935, %v1459, -1e+30
      %v1463 = vsel %vm1048, %v1460, -inf
      %1464 = vmax.xlane.f32.xlu0 %v1463
      %v1465 = vpop.xlane.xlu0 %1464
      %v1466 = vsel %vm1048, %v1461, -inf
      %1467 = vmax.xlane.f32.xlu0 %v1466
      %v1468 = vpop.xlane.xlu0 %1467
      %v1469 = vsel %vm1048, %v1462, -inf
      %1470 = vmax.xlane.f32.xlu0 %v1469
      %v1471 = vpop.xlane.xlu0 %1470
      %v1472 = vsub.f32 %v1460, %v1465
      %v1473 = vsub.f32 %v1461, %v1468
      %v1474 = vsub.f32 %v1462, %v1471
      %v1475 = vmul.f32 %v1472, 1.442695
      %v1476 = vpow.pop %v1475
      %v1477 = vmul.f32 %v1473, 1.442695
      %v1478 = vpow.pop %v1477
      %v1479 = vmul.f32 %v1474, 1.442695
      %v1480 = vpow.pop %v1479
      %v1481 = vsel %vm1048, %v1476, 0.0
      %1482 = vadd.xlane.f32.xlu0 %v1481
      %v1483 = vpop.xlane.xlu0 %1482
      %v1484 = vsel %vm1048, %v1478, 0.0
      %1485 = vadd.xlane.f32.xlu0 %v1484
      %v1486 = vpop.xlane.xlu0 %1485
      %v1487 = vsel %vm1048, %v1480, 0.0
      %1488 = vadd.xlane.f32.xlu0 %v1487
      %v1489 = vpop.xlane.xlu0 %1488
      %v1490 = vrcp.pop %v1483
      %v1491 = vrcp.pop %v1486
      %v1492 = vrcp.pop %v1489
      %v1493 = vmul.f32 %v1476, %v1490
      %v1494 = vmul.f32 %v1478, %v1491
      %v1495 = vmul.f32 %v1480, %v1492
      %v1496 = vpack.c.bf16 %v1494, %v1493
      %v1497 = vpack.c.bf16 %v1495, %v1495
      %1498 = vrot.lane.b32.xlu0 %v980, 48
      %v1499 = vpop.permute.xlu0 %1498
      %1500 = vrot.lane.b32.xlu0 %v981, 48
      %v1501 = vpop.permute.xlu0 %1500
      %v1504 = vsel %vm1048, %v1496, 0
      %v1507 = vsel %vm1048, %v1497, 0
      %v1510 = vsel %vm990, %v1501, 0
      %1512 = vmatprep.subr.bf16.mxu0 0
      %1513 = vmatpush1.bf16.msra.mxu0 0
      %1514 = vmatprep.subr.bf16.mxu0 0
      %1515 = vmatpush1.bf16.msra.mxu0 0
      %1516 = vmatprep.subr.bf16.mxu0 0
      %1517 = vmatpush1.bf16.msra.mxu0 0
      %1518 = vmatprep.subr.bf16.mxu0 0
      %1519 = vmatpush1.bf16.msra.mxu0 0
      %1520 = vmatprep.subr.bf16.mxu0 0
      %1521 = vmatpush1.bf16.msra.mxu0 0
      %1522 = vmatprep.subr.bf16.mxu0 0
      %1523 = vmatpush1.bf16.msra.mxu0 0
      %1524 = vmatprep.subr.bf16.mxu0 0
      %1525 = vmatpush1.bf16.msra.mxu0 %v1510
      %1526 = vmatprep.subr.bf16.mxu0 0
      %1527 = vmatpush1.bf16.msra.mxu0 %v1499
      %1528 = vmatprep.subr.bf16.mxu0 0
      %1529 = vmatpush2.bf16.msra.mxu0 0
      %1530 = vmatprep.subr.bf16.mxu0 0
      %1531 = vmatpush2.bf16.msra.mxu0 0
      %1532 = vmatprep.subr.bf16.mxu0 0
      %1533 = vmatpush2.bf16.msra.mxu0 0
      %1534 = vmatprep.subr.bf16.mxu0 0
      %1535 = vmatpush2.bf16.msra.mxu0 0
      %1536 = vmatprep.subr.bf16.mxu0 0
      %1537 = vmatpush2.bf16.msra.mxu0 0
      %1538 = vmatprep.subr.bf16.mxu0 0
      %1539 = vmatpush2.bf16.msra.mxu0 0
      %1540 = vmatprep.subr.bf16.mxu0 0
      %1541 = vmatpush2.bf16.msra.mxu0 0
      %1542 = vmatprep.subr.bf16.mxu0 0
      %1543 = vmatpush2.bf16.msra.mxu0 0
      %1544 = vmatprep.mubr.bf16.mxu0 0
      %1545 = vmatmul.mubr.bf16.gmra.mxu0 %v1504
      %v1546 = vpop.f32.mrf.mxu0
      %v1547 = vadd.f32 0.0, %v1546
      %v1548 = vpop.f32.mrf.mxu0
      %v1549 = vpop.f32.mrf.mxu0
      %v1550 = vadd.f32 0.0, %v1549
      %v1551 = vpop.f32.mrf.mxu0
      %1552 = vmatprep.mubr.bf16.mxu0 0
      %1553 = vmatmul.mubr.bf16.gmra.mxu0 %v1507
      %v1554 = vpop.f32.mrf.mxu0
      %v1555 = vadd.f32 0.0, %v1554
      %v1556 = vpop.f32.mrf.mxu0
      %v1557 = vpop.f32.mrf.mxu0
      %v1558 = vpop.f32.mrf.mxu0
      %1559 = vdwg.mxu0
      %1560 = vrot.lane.b32.xlu0 %v920, 72
      %v1561 = vpop.permute.xlu0 %1560
      %1562 = vrot.lane.b32.xlu0 %v923, 72
      %v1563 = vpop.permute.xlu0 %1562
      %1564 = vrot.lane.b32.xlu0 %v928, 72
      %v1565 = vpop.permute.xlu0 %1564
      %1569 = vxpose.xlu0.b32.start [1/16] %v1561, 128
      %1570 = vxpose.xlu0.b32.cont [2/16] %v1563, 128
      %1571 = vxpose.xlu0.b32.cont [3/16] %v1565, 128
      %1572 = vxpose.xlu0.b32.cont [4/16] 0.0, 128
      %1573 = vxpose.xlu0.b32.cont [5/16] 0.0, 128
      %1574 = vxpose.xlu0.b32.cont [6/16] 0.0, 128
      %1575 = vxpose.xlu0.b32.cont [7/16] 0.0, 128
      %1576 = vxpose.xlu0.b32.cont [8/16] 0.0, 128
      %1577 = vxpose.xlu0.b32.cont [9/16] 0.0, 128
      %1578 = vxpose.xlu0.b32.cont [10/16] 0.0, 128
      %1579 = vxpose.xlu0.b32.cont [11/16] 0.0, 128
      %1580 = vxpose.xlu0.b32.cont [12/16] 0.0, 128
      %1581 = vxpose.xlu0.b32.cont [13/16] 0.0, 128
      %1582 = vxpose.xlu0.b32.cont [14/16] 0.0, 128
      %1583 = vxpose.xlu0.b32.cont [15/16] 0.0, 128
      %1584 = vxpose.xlu0.b32.end [16/16] 0.0, 128
      %v1585 = vpop.trf.xlu0
      %v1586 = vpop.trf.xlu0
      %v1587 = vpop.trf.xlu0
      %v1588 = vpop.trf.xlu0
      %v1589 = vpop.trf.xlu0
      %v1590 = vpop.trf.xlu0
      %v1591 = vpop.trf.xlu0
      %v1592 = vpop.trf.xlu0
      %v1593 = vpop.trf.xlu0
      %v1594 = vpop.trf.xlu0
      %v1595 = vpop.trf.xlu0
      %v1596 = vpop.trf.xlu0
      %v1597 = vpop.trf.xlu0
      %v1598 = vpop.trf.xlu0
      %v1599 = vpop.trf.xlu0
      %v1600 = vpop.trf.xlu0
      %v1601 = vpack.c.bf16 %v1585, %v1585
      %1602 = vrot.lane.b32.xlu0 %v980, 104
      %v1603 = vpop.permute.xlu0 %1602
      %1604 = vrot.lane.b32.xlu0 %v981, 104
      %v1605 = vpop.permute.xlu0 %1604
      %v1607 = vsel %vm983, %v1603, 0
      %v1610 = vsel %vm983, %v1605, 0
      %v1613 = vsel %vm990, %v1601, 0
      %1615 = vmatprep.subr.bf16.mxu0 0
      %1616 = vmatpush1.bf16.msra.mxu0 0
      %1617 = vmatprep.subr.bf16.mxu0 0
      %1618 = vmatpush1.bf16.msra.mxu0 0
      %1619 = vmatprep.subr.bf16.mxu0 0
      %1620 = vmatpush1.bf16.msra.mxu0 0
      %1621 = vmatprep.subr.bf16.mxu0 0
      %1622 = vmatpush1.bf16.msra.mxu0 0
      %1623 = vmatprep.subr.bf16.mxu0 0
      %1624 = vmatpush1.bf16.msra.mxu0 0
      %1625 = vmatprep.subr.bf16.mxu0 0
      %1626 = vmatpush1.bf16.msra.mxu0 0
      %1627 = vmatprep.subr.bf16.mxu0 0
      %1628 = vmatpush1.bf16.msra.mxu0 0
      %1629 = vmatprep.subr.bf16.mxu0 0
      %1630 = vmatpush1.bf16.msra.mxu0 %v1613
      %1631 = vmatprep.subr.bf16.mxu0 0
      %1632 = vmatpush2.bf16.msra.mxu0 0
      %1633 = vmatprep.subr.bf16.mxu0 0
      %1634 = vmatpush2.bf16.msra.mxu0 0
      %1635 = vmatprep.subr.bf16.mxu0 0
      %1636 = vmatpush2.bf16.msra.mxu0 0
      %1637 = vmatprep.subr.bf16.mxu0 0
      %1638 = vmatpush2.bf16.msra.mxu0 0
      %1639 = vmatprep.subr.bf16.mxu0 0
      %1640 = vmatpush2.bf16.msra.mxu0 0
      %1641 = vmatprep.subr.bf16.mxu0 0
      %1642 = vmatpush2.bf16.msra.mxu0 0
      %1643 = vmatprep.subr.bf16.mxu0 0
      %1644 = vmatpush2.bf16.msra.mxu0 0
      %1645 = vmatprep.subr.bf16.mxu0 0
      %1646 = vmatpush2.bf16.msra.mxu0 0
      %1647 = vmatprep.mubr.bf16.mxu0 0
      %1648 = vmatmul.mubr.bf16.gmra.mxu0 %v1607
      %v1649 = vpop.f32.mrf.mxu0
      %v1650 = vadd.f32 0.0, %v1649
      %v1651 = vpop.f32.mrf.mxu0
      %v1652 = vpop.f32.mrf.mxu0
      %v1653 = vadd.f32 0.0, %v1652
      %v1654 = vpop.f32.mrf.mxu0
      %1655 = vmatprep.mubr.bf16.mxu0 0
      %1656 = vmatmul.mubr.bf16.gmra.mxu0 %v1610
      %v1657 = vpop.f32.mrf.mxu0
      %v1658 = vadd.f32 0.0, %v1657
      %v1659 = vpop.f32.mrf.mxu0
      %v1660 = vpop.f32.mrf.mxu0
      %v1661 = vpop.f32.mrf.mxu0
      %1662 = vdwg.mxu0
      %v1663 = vmul.f32 %v1650, 0.35355338
      %v1664 = vmul.f32 %v1653, 0.35355338
      %v1665 = vmul.f32 %v1658, 0.35355338
      %v1666 = vsel %vm935, %v1663, -1e+30
      %v1667 = vsel %vm935, %v1664, -1e+30
      %v1668 = vsel %vm935, %v1665, -1e+30
      %v1669 = vsel %vm1048, %v1666, -inf
      %1670 = vmax.xlane.f32.xlu0 %v1669
      %v1671 = vpop.xlane.xlu0 %1670
      %v1672 = vsel %vm1048, %v1667, -inf
      %1673 = vmax.xlane.f32.xlu0 %v1672
      %v1674 = vpop.xlane.xlu0 %1673
      %v1675 = vsel %vm1048, %v1668, -inf
      %1676 = vmax.xlane.f32.xlu0 %v1675
      %v1677 = vpop.xlane.xlu0 %1676
      %v1678 = vsub.f32 %v1666, %v1671
      %v1679 = vsub.f32 %v1667, %v1674
      %v1680 = vsub.f32 %v1668, %v1677
      %v1681 = vmul.f32 %v1678, 1.442695
      %v1682 = vpow.pop %v1681
      %v1683 = vmul.f32 %v1679, 1.442695
      %v1684 = vpow.pop %v1683
      %v1685 = vmul.f32 %v1680, 1.442695
      %v1686 = vpow.pop %v1685
      %v1687 = vsel %vm1048, %v1682, 0.0
      %1688 = vadd.xlane.f32.xlu0 %v1687
      %v1689 = vpop.xlane.xlu0 %1688
      %v1690 = vsel %vm1048, %v1684, 0.0
      %1691 = vadd.xlane.f32.xlu0 %v1690
      %v1692 = vpop.xlane.xlu0 %1691
      %v1693 = vsel %vm1048, %v1686, 0.0
      %1694 = vadd.xlane.f32.xlu0 %v1693
      %v1695 = vpop.xlane.xlu0 %1694
      %v1696 = vrcp.pop %v1689
      %v1697 = vrcp.pop %v1692
      %v1698 = vrcp.pop %v1695
      %v1699 = vmul.f32 %v1682, %v1696
      %v1700 = vmul.f32 %v1684, %v1697
      %v1701 = vmul.f32 %v1686, %v1698
      %v1702 = vpack.c.bf16 %v1700, %v1699
      %v1703 = vpack.c.bf16 %v1701, %v1701
      %1704 = vrot.lane.b32.xlu0 %v980, 40
      %v1705 = vpop.permute.xlu0 %1704
      %1706 = vrot.lane.b32.xlu0 %v981, 40
      %v1707 = vpop.permute.xlu0 %1706
      %v1710 = vsel %vm1048, %v1702, 0
      %v1713 = vsel %vm1048, %v1703, 0
      %v1716 = vsel %vm990, %v1707, 0
      %1718 = vmatprep.subr.bf16.mxu0 0
      %1719 = vmatpush1.bf16.msra.mxu0 0
      %1720 = vmatprep.subr.bf16.mxu0 0
      %1721 = vmatpush1.bf16.msra.mxu0 0
      %1722 = vmatprep.subr.bf16.mxu0 0
      %1723 = vmatpush1.bf16.msra.mxu0 0
      %1724 = vmatprep.subr.bf16.mxu0 0
      %1725 = vmatpush1.bf16.msra.mxu0 0
      %1726 = vmatprep.subr.bf16.mxu0 0
      %1727 = vmatpush1.bf16.msra.mxu0 0
      %1728 = vmatprep.subr.bf16.mxu0 0
      %1729 = vmatpush1.bf16.msra.mxu0 0
      %1730 = vmatprep.subr.bf16.mxu0 0
      %1731 = vmatpush1.bf16.msra.mxu0 %v1716
      %1732 = vmatprep.subr.bf16.mxu0 0
      %1733 = vmatpush1.bf16.msra.mxu0 %v1705
      %1734 = vmatprep.subr.bf16.mxu0 0
      %1735 = vmatpush2.bf16.msra.mxu0 0
      %1736 = vmatprep.subr.bf16.mxu0 0
      %1737 = vmatpush2.bf16.msra.mxu0 0
      %1738 = vmatprep.subr.bf16.mxu0 0
      %1739 = vmatpush2.bf16.msra.mxu0 0
      %1740 = vmatprep.subr.bf16.mxu0 0
      %1741 = vmatpush2.bf16.msra.mxu0 0
      %1742 = vmatprep.subr.bf16.mxu0 0
      %1743 = vmatpush2.bf16.msra.mxu0 0
      %1744 = vmatprep.subr.bf16.mxu0 0
      %1745 = vmatpush2.bf16.msra.mxu0 0
      %1746 = vmatprep.subr.bf16.mxu0 0
      %1747 = vmatpush2.bf16.msra.mxu0 0
      %1748 = vmatprep.subr.bf16.mxu0 0
      %1749 = vmatpush2.bf16.msra.mxu0 0
      %1750 = vmatprep.mubr.bf16.mxu0 0
      %1751 = vmatmul.mubr.bf16.gmra.mxu0 %v1710
      %v1752 = vpop.f32.mrf.mxu0
      %v1753 = vadd.f32 0.0, %v1752
      %v1754 = vpop.f32.mrf.mxu0
      %v1755 = vpop.f32.mrf.mxu0
      %v1756 = vadd.f32 0.0, %v1755
      %v1757 = vpop.f32.mrf.mxu0
      %1758 = vmatprep.mubr.bf16.mxu0 0
      %1759 = vmatmul.mubr.bf16.gmra.mxu0 %v1713
      %v1760 = vpop.f32.mrf.mxu0
      %v1761 = vadd.f32 0.0, %v1760
      %v1762 = vpop.f32.mrf.mxu0
      %v1763 = vpop.f32.mrf.mxu0
      %v1764 = vpop.f32.mrf.mxu0
      %1765 = vdwg.mxu0
      %1769 = vrot.lane.b32.xlu0 %v1341, 8
      %v1770 = vpop.permute.xlu0 %1769
      %1771 = vrot.lane.b32.xlu0 %v1344, 8
      %v1772 = vpop.permute.xlu0 %1771
      %1773 = vrot.lane.b32.xlu0 %v1349, 8
      %v1774 = vpop.permute.xlu0 %1773
      %1781 = vrot.lane.b32.xlu0 %v1547, 16
      %v1782 = vpop.permute.xlu0 %1781
      %1783 = vrot.lane.b32.xlu0 %v1550, 16
      %v1784 = vpop.permute.xlu0 %1783
      %1785 = vrot.lane.b32.xlu0 %v1555, 16
      %v1786 = vpop.permute.xlu0 %1785
      %1793 = vrot.lane.b32.xlu0 %v1753, 24
      %v1794 = vpop.permute.xlu0 %1793
      %1795 = vrot.lane.b32.xlu0 %v1756, 24
      %v1796 = vpop.permute.xlu0 %1795
      %1797 = vrot.lane.b32.xlu0 %v1761, 24
      %v1798 = vpop.permute.xlu0 %1797
      %v1802 = vsel %vm983, %v1135, %v1770
      %v1803 = vsel %vm983, %v1138, %v1772
      %v1804 = vsel %vm983, %v1143, %v1774
      %vm1805 = vcmask 130048
      %v1806 = vsel %vm1805, %v1802, %v1782
      %v1807 = vsel %vm1805, %v1803, %v1784
      %v1808 = vsel %vm1805, %v1804, %v1786
      %v1809 = vsel %vm1048, %v1806, %v1794
      %v1810 = vsel %vm1048, %v1807, %v1796
      %v1811 = vsel %vm1048, %v1808, %v1798
      %v1812 = vld [vmem:[%s8] sm:$0xf]
      %v1813 = vld [vmem:[%s8 + $0x4] sm:$0xf]
      %v1814 = vld [vmem:[%s8 + $0x8] sm:$0xf]
      %v1815 = vld [vmem:[%s8 + $0xc] sm:$0xf]
      %v1816 = vpack.c.bf16 %v1810, %v1809
      %v1817 = vpack.c.bf16 %v1811, %v1811
      %v1822 = vunpack.c.l.b16 %v1812
      %v1823 = vunpack.c.l.b16 %v1813
      %v1824 = vunpack.c.l.b16 %v1814
      %v1825 = vunpack.c.l.b16 %v1815
      %v1826 = vpack.c.b16 %v1823, %v1822
      %v1827 = vpack.c.b16 %v1825, %v1824
      %v1831 = vsel %vm793, %v1816, 0
      %v1834 = vsel %vm793, %v1817, 0
      %1836 = vmatprep.subr.bf16.mxu0 0
      %1837 = vmatpush1.bf16.msra.mxu0 0
      %1838 = vmatprep.subr.bf16.mxu0 0
      %1839 = vmatpush1.bf16.msra.mxu0 0
      %1840 = vmatprep.subr.bf16.mxu0 0
      %1841 = vmatpush1.bf16.msra.mxu0 0
      %1842 = vmatprep.subr.bf16.mxu0 0
      %1843 = vmatpush1.bf16.msra.mxu0 0
      %1844 = vmatprep.subr.bf16.mxu0 0
      %1845 = vmatpush1.bf16.msra.mxu0 0
      %1846 = vmatprep.subr.bf16.mxu0 0
      %1847 = vmatpush1.bf16.msra.mxu0 0
      %1848 = vmatprep.subr.bf16.mxu0 0
      %1849 = vmatpush1.bf16.msra.mxu0 %v1827
      %1850 = vmatprep.subr.bf16.mxu0 0
      %1851 = vmatpush1.bf16.msra.mxu0 %v1826
      %1852 = vmatprep.subr.bf16.mxu0 0
      %1853 = vmatpush2.bf16.msra.mxu0 0
      %1854 = vmatprep.subr.bf16.mxu0 0
      %1855 = vmatpush2.bf16.msra.mxu0 0
      %1856 = vmatprep.subr.bf16.mxu0 0
      %1857 = vmatpush2.bf16.msra.mxu0 0
      %1858 = vmatprep.subr.bf16.mxu0 0
      %1859 = vmatpush2.bf16.msra.mxu0 0
      %1860 = vmatprep.subr.bf16.mxu0 0
      %1861 = vmatpush2.bf16.msra.mxu0 0
      %1862 = vmatprep.subr.bf16.mxu0 0
      %1863 = vmatpush2.bf16.msra.mxu0 0
      %1864 = vmatprep.subr.bf16.mxu0 0
      %1865 = vmatpush2.bf16.msra.mxu0 0
      %1866 = vmatprep.subr.bf16.mxu0 0
      %1867 = vmatpush2.bf16.msra.mxu0 0
      %1868 = vmatprep.mubr.bf16.mxu0 0
      %1869 = vmatmul.mubr.bf16.gmra.mxu0 %v1831
      %v1870 = vpop.f32.mrf.mxu0
      %v1871 = vadd.f32 0.0, %v1870
      %v1872 = vpop.f32.mrf.mxu0
      %v1873 = vpop.f32.mrf.mxu0
      %v1874 = vadd.f32 0.0, %v1873
      %v1875 = vpop.f32.mrf.mxu0
      %1876 = vmatprep.mubr.bf16.mxu0 0
      %1877 = vmatmul.mubr.bf16.gmra.mxu0 %v1834
      %v1878 = vpop.f32.mrf.mxu0
      %v1879 = vadd.f32 0.0, %v1878
      %v1880 = vpop.f32.mrf.mxu0
      %v1881 = vpop.f32.mrf.mxu0
      %v1882 = vpop.f32.mrf.mxu0
      %1883 = vdwg.mxu0
      %v1884 = vadd.f32 %v790, %v1871
      %v1885 = vadd.f32 %v791, %v1874
      %v1886 = vadd.f32 %v792, %v1879
      %v1887 = vld [vmem:[%s9] sm:$0x1]
      %v1889 = vlaneseq
      %v1890 = vshrl.u32 %v1889, 7
      %v1891 = vsub.s32 0, %v1890
      %v1892 = vrot.slane %v1887, %v1891
      %v1894 = vadd.f32 %v1884, %v1892
      %v1895 = vadd.f32 %v1885, %v1892
      %v1896 = vadd.f32 %v1886, %v1892
      %v1897 = vsel %vm793, %v1894, 0.0
      %1898 = vadd.xlane.f32.xlu0 %v1897
      %v1899 = vpop.xlane.xlu0 %1898
      %v1900 = vsel %vm793, %v1895, 0.0
      %1901 = vadd.xlane.f32.xlu0 %v1900
      %v1902 = vpop.xlane.xlu0 %1901
      %v1903 = vsel %vm793, %v1896, 0.0
      %1904 = vadd.xlane.f32.xlu0 %v1903
      %v1905 = vpop.xlane.xlu0 %1904
      %v1906 = vmul.f32 %v1899, %v803
      %v1907 = vmul.f32 %v1902, %v803
      %v1908 = vmul.f32 %v1905, %v803
      %v1909 = vsub.f32 %v1894, %v1906
      %v1910 = vsub.f32 %v1895, %v1907
      %v1911 = vsub.f32 %v1896, %v1908
      %v1912 = vmul.f32 %v1909, %v1909
      %v1913 = vmul.f32 %v1910, %v1910
      %v1914 = vmul.f32 %v1911, %v1911
      %v1915 = vsel %vm793, %v1912, 0.0
      %1916 = vadd.xlane.f32.xlu0 %v1915
      %v1917 = vpop.xlane.xlu0 %1916
      %v1918 = vsel %vm793, %v1913, 0.0
      %1919 = vadd.xlane.f32.xlu0 %v1918
      %v1920 = vpop.xlane.xlu0 %1919
      %v1921 = vsel %vm793, %v1914, 0.0
      %1922 = vadd.xlane.f32.xlu0 %v1921
      %v1923 = vpop.xlane.xlu0 %1922
      %v1924 = vmul.f32 %v1917, %v803
      %v1925 = vmul.f32 %v1920, %v803
      %v1926 = vmul.f32 %v1923, %v803
      %v1927 = vadd.f32 %v1924, 1e-05
      %v1928 = vadd.f32 %v1925, 1e-05
      %v1929 = vadd.f32 %v1926, 1e-05
      %v1930 = vrsqrt.pop %v1927
      %v1931 = vrsqrt.pop %v1928
      %v1932 = vrsqrt.pop %v1929
      %v1933 = vmul.f32 %v1909, %v1930
      %v1934 = vmul.f32 %v1910, %v1931
      %v1935 = vmul.f32 %v1911, %v1932
      %v1936 = vld [vmem:[%s10] sm:$0x1]
      %v1938 = vlaneseq
      %v1939 = vshrl.u32 %v1938, 7
      %v1940 = vsub.s32 0, %v1939
      %v1941 = vrot.slane %v1936, %v1940
      %v1943 = vmul.f32 %v1933, %v1941
      %v1944 = vmul.f32 %v1934, %v1941
      %v1945 = vmul.f32 %v1935, %v1941
      %v1946 = vld [vmem:[%s11] sm:$0x1]
      %v1948 = vlaneseq
      %v1949 = vshrl.u32 %v1948, 7
      %v1950 = vsub.s32 0, %v1949
      %v1951 = vrot.slane %v1946, %v1950
      %v1953 = vadd.f32 %v1943, %v1951
      %v1954 = vadd.f32 %v1944, %v1951
      %v1955 = vadd.f32 %v1945, %v1951
      %v1956 = vld [vmem:[%s12] sm:$0xf]
      %v1957 = vld [vmem:[%s12 + $0x4] sm:$0xf]
      %v1958 = vld [vmem:[%s12 + $0x8] sm:$0xf]
      %v1959 = vld [vmem:[%s12 + $0xc] sm:$0xf]
      %v1960 = vpack.c.bf16 %v1954, %v1953
      %v1961 = vpack.c.bf16 %v1955, %v1955
      %v1962 = vld [vmem:[%s13] sm:$0x1]
      %v1964 = vlaneseq
      %v1965 = vshrl.u32 %v1964, 7
      %v1966 = vsub.s32 0, %v1965
      %v1967 = vrot.slane %v1962, %v1966
      %v1973 = vunpack.c.l.b16 %v1956
      %v1974 = vunpack.c.l.b16 %v1957
      %v1975 = vunpack.c.l.b16 %v1958
      %v1976 = vunpack.c.l.b16 %v1959
      %v1977 = vpack.c.b16 %v1974, %v1973
      %v1978 = vpack.c.b16 %v1976, %v1975
      %v1982 = vsel %vm793, %v1960, 0
      %v1985 = vsel %vm793, %v1961, 0
      %1987 = vmatprep.subr.bf16.mxu0 0
      %1988 = vmatpush1.bf16.msra.mxu0 0
      %1989 = vmatprep.subr.bf16.mxu0 0
      %1990 = vmatpush1.bf16.msra.mxu0 0
      %1991 = vmatprep.subr.bf16.mxu0 0
      %1992 = vmatpush1.bf16.msra.mxu0 0
      %1993 = vmatprep.subr.bf16.mxu0 0
      %1994 = vmatpush1.bf16.msra.mxu0 0
      %1995 = vmatprep.subr.bf16.mxu0 0
      %1996 = vmatpush1.bf16.msra.mxu0 0
      %1997 = vmatprep.subr.bf16.mxu0 0
      %1998 = vmatpush1.bf16.msra.mxu0 0
      %1999 = vmatprep.subr.bf16.mxu0 0
      %2000 = vmatpush1.bf16.msra.mxu0 %v1978
      %2001 = vmatprep.subr.bf16.mxu0 0
      %2002 = vmatpush1.bf16.msra.mxu0 %v1977
      %2003 = vmatprep.subr.bf16.mxu0 0
      %2004 = vmatpush2.bf16.msra.mxu0 0
      %2005 = vmatprep.subr.bf16.mxu0 0
      %2006 = vmatpush2.bf16.msra.mxu0 0
      %2007 = vmatprep.subr.bf16.mxu0 0
      %2008 = vmatpush2.bf16.msra.mxu0 0
      %2009 = vmatprep.subr.bf16.mxu0 0
      %2010 = vmatpush2.bf16.msra.mxu0 0
      %2011 = vmatprep.subr.bf16.mxu0 0
      %2012 = vmatpush2.bf16.msra.mxu0 0
      %2013 = vmatprep.subr.bf16.mxu0 0
      %2014 = vmatpush2.bf16.msra.mxu0 0
      %2015 = vmatprep.subr.bf16.mxu0 0
      %2016 = vmatpush2.bf16.msra.mxu0 0
      %2017 = vmatprep.subr.bf16.mxu0 0
      %2018 = vmatpush2.bf16.msra.mxu0 0
      %2019 = vmatprep.mubr.bf16.mxu0 0
      %2020 = vmatmul.mubr.bf16.gmra.mxu0 %v1982
      %v2021 = vpop.f32.mrf.mxu0
      %v2022 = vadd.f32 %v1967, %v2021
      %v2023 = vpop.f32.mrf.mxu0
      %v2024 = vpop.f32.mrf.mxu0
      %v2025 = vadd.f32 %v1967, %v2024
      %v2026 = vpop.f32.mrf.mxu0
      %2027 = vmatprep.mubr.bf16.mxu0 0
      %2028 = vmatmul.mubr.bf16.gmra.mxu0 %v1985
      %v2029 = vpop.f32.mrf.mxu0
      %v2030 = vadd.f32 %v1967, %v2029
      %v2031 = vpop.f32.mrf.mxu0
      %v2032 = vpop.f32.mrf.mxu0
      %v2033 = vpop.f32.mrf.mxu0
      %2034 = vdwg.mxu0
      %v2035 = vmul.f32 %v2022, 0.5
      %v2036 = vmul.f32 %v2025, 0.5
      %v2037 = vmul.f32 %v2030, 0.5
      %v2038 = vmul.f32 %v2022, 0.044715
      %v2039 = vmul.f32 %v2025, 0.044715
      %v2040 = vmul.f32 %v2030, 0.044715
      %v2041 = vmul.f32 %v2038, %v2022
      %v2042 = vmul.f32 %v2039, %v2025
      %v2043 = vmul.f32 %v2040, %v2030
      %v2044 = vmul.f32 %v2041, %v2022
      %v2045 = vmul.f32 %v2042, %v2025
      %v2046 = vmul.f32 %v2043, %v2030
      %v2047 = vadd.f32 %v2022, %v2044
      %v2048 = vadd.f32 %v2025, %v2045
      %v2049 = vadd.f32 %v2030, %v2046
      %v2050 = vmul.f32 %v2047, 0.7978846
      %v2051 = vmul.f32 %v2048, 0.7978846
      %v2052 = vmul.f32 %v2049, 0.7978846
      %v2053 = vtanh.pop %v2050
      %v2054 = vtanh.pop %v2051
      %v2055 = vtanh.pop %v2052
      %v2056 = vadd.f32 %v2053, 1.0
      %v2057 = vadd.f32 %v2054, 1.0
      %v2058 = vadd.f32 %v2055, 1.0
      %v2059 = vmul.f32 %v2035, %v2056
      %v2060 = vmul.f32 %v2036, %v2057
      %v2061 = vmul.f32 %v2037, %v2058
      %v2062 = vld [vmem:[%s14] sm:$0xf]
      %v2063 = vld [vmem:[%s14 + $0x4] sm:$0xf]
      %v2064 = vld [vmem:[%s14 + $0x8] sm:$0xf]
      %v2065 = vld [vmem:[%s14 + $0xc] sm:$0xf]
      %v2066 = vld [vmem:[%s14 + $0x10] sm:$0xf]
      %v2067 = vld [vmem:[%s14 + $0x14] sm:$0xf]
      %v2068 = vld [vmem:[%s14 + $0x18] sm:$0xf]
      %v2069 = vld [vmem:[%s14 + $0x1c] sm:$0xf]
      %v2070 = vld [vmem:[%s14 + $0x20] sm:$0xf]
      %v2071 = vld [vmem:[%s14 + $0x24] sm:$0xf]
      %v2072 = vld [vmem:[%s14 + $0x28] sm:$0xf]
      %v2073 = vld [vmem:[%s14 + $0x2c] sm:$0xf]
      %v2074 = vld [vmem:[%s14 + $0x30] sm:$0xf]
      %v2075 = vld [vmem:[%s14 + $0x34] sm:$0xf]
      %v2076 = vld [vmem:[%s14 + $0x38] sm:$0xf]
      %v2077 = vld [vmem:[%s14 + $0x3c] sm:$0xf]
      %v2078 = vpack.c.bf16 %v2060, %v2059
      %v2079 = vpack.c.bf16 %v2061, %v2061
      %v2096 = vunpack.c.l.b16 %v2062
      %v2097 = vunpack.c.l.b16 %v2063
      %v2098 = vunpack.c.l.b16 %v2064
      %v2099 = vunpack.c.l.b16 %v2065
      %v2100 = vunpack.c.l.b16 %v2066
      %v2101 = vunpack.c.l.b16 %v2067
      %v2102 = vunpack.c.l.b16 %v2068
      %v2103 = vunpack.c.l.b16 %v2069
      %v2104 = vunpack.c.l.b16 %v2070
      %v2105 = vunpack.c.l.b16 %v2071
      %v2106 = vunpack.c.l.b16 %v2072
      %v2107 = vunpack.c.l.b16 %v2073
      %v2108 = vunpack.c.l.b16 %v2074
      %v2109 = vunpack.c.l.b16 %v2075
      %v2110 = vunpack.c.l.b16 %v2076
      %v2111 = vunpack.c.l.b16 %v2077
      %v2112 = vpack.c.b16 %v2097, %v2096
      %v2113 = vpack.c.b16 %v2099, %v2098
      %v2114 = vpack.c.b16 %v2101, %v2100
      %v2115 = vpack.c.b16 %v2103, %v2102
      %v2116 = vpack.c.b16 %v2105, %v2104
      %v2117 = vpack.c.b16 %v2107, %v2106
      %v2118 = vpack.c.b16 %v2109, %v2108
      %v2119 = vpack.c.b16 %v2111, %v2110
      %2128 = vmatprep.subr.bf16.mxu0 0
      %2129 = vmatpush1.bf16.msra.mxu0 %v2119
      %2130 = vmatprep.subr.bf16.mxu0 0
      %2131 = vmatpush1.bf16.msra.mxu0 %v2118
      %2132 = vmatprep.subr.bf16.mxu0 0
      %2133 = vmatpush1.bf16.msra.mxu0 %v2117
      %2134 = vmatprep.subr.bf16.mxu0 0
      %2135 = vmatpush1.bf16.msra.mxu0 %v2116
      %2136 = vmatprep.subr.bf16.mxu0 0
      %2137 = vmatpush1.bf16.msra.mxu0 %v2115
      %2138 = vmatprep.subr.bf16.mxu0 0
      %2139 = vmatpush1.bf16.msra.mxu0 %v2114
      %2140 = vmatprep.subr.bf16.mxu0 0
      %2141 = vmatpush1.bf16.msra.mxu0 %v2113
      %2142 = vmatprep.subr.bf16.mxu0 0
      %2143 = vmatpush1.bf16.msra.mxu0 %v2112
      %2144 = vmatprep.subr.bf16.mxu0 0
      %2145 = vmatpush2.bf16.msra.mxu0 0
      %2146 = vmatprep.subr.bf16.mxu0 0
      %2147 = vmatpush2.bf16.msra.mxu0 0
      %2148 = vmatprep.subr.bf16.mxu0 0
      %2149 = vmatpush2.bf16.msra.mxu0 0
      %2150 = vmatprep.subr.bf16.mxu0 0
      %2151 = vmatpush2.bf16.msra.mxu0 0
      %2152 = vmatprep.subr.bf16.mxu0 0
      %2153 = vmatpush2.bf16.msra.mxu0 0
      %2154 = vmatprep.subr.bf16.mxu0 0
      %2155 = vmatpush2.bf16.msra.mxu0 0
      %2156 = vmatprep.subr.bf16.mxu0 0
      %2157 = vmatpush2.bf16.msra.mxu0 0
      %2158 = vmatprep.subr.bf16.mxu0 0
      %2159 = vmatpush2.bf16.msra.mxu0 0
      %2160 = vmatprep.mubr.bf16.mxu0 0
      %2161 = vmatmul.mubr.bf16.gmra.mxu0 %v2078
      %v2162 = vpop.f32.mrf.mxu0
      %v2163 = vadd.f32 0.0, %v2162
      %v2164 = vpop.f32.mrf.mxu0
      %v2165 = vpop.f32.mrf.mxu0
      %v2166 = vadd.f32 0.0, %v2165
      %v2167 = vpop.f32.mrf.mxu0
      %2168 = vmatprep.mubr.bf16.mxu0 0
      %2169 = vmatmul.mubr.bf16.gmra.mxu0 %v2079
      %v2170 = vpop.f32.mrf.mxu0
      %v2171 = vadd.f32 0.0, %v2170
      %v2172 = vpop.f32.mrf.mxu0
      %v2173 = vpop.f32.mrf.mxu0
      %v2174 = vpop.f32.mrf.mxu0
      %2175 = vdwg.mxu0
      %v2176 = vadd.f32 %v1894, %v2163
      %v2177 = vadd.f32 %v1895, %v2166
      %v2178 = vadd.f32 %v1896, %v2171
      %v2179 = vld [vmem:[%s15] sm:$0x1]
      %v2181 = vlaneseq
      %v2182 = vshrl.u32 %v2181, 7
      %v2183 = vsub.s32 0, %v2182
      %v2184 = vrot.slane %v2179, %v2183
      %v2186 = vadd.f32 %v2176, %v2184
      %v2187 = vadd.f32 %v2177, %v2184
      %v2188 = vadd.f32 %v2178, %v2184
      %v2189 = vsel %vm793, %v2186, 0.0
      %2190 = vadd.xlane.f32.xlu0 %v2189
      %v2191 = vpop.xlane.xlu0 %2190
      %v2192 = vsel %vm793, %v2187, 0.0
      %2193 = vadd.xlane.f32.xlu0 %v2192
      %v2194 = vpop.xlane.xlu0 %2193
      %v2195 = vsel %vm793, %v2188, 0.0
      %2196 = vadd.xlane.f32.xlu0 %v2195
      %v2197 = vpop.xlane.xlu0 %2196
      %v2198 = vmul.f32 %v2191, %v803
      %v2199 = vmul.f32 %v2194, %v803
      %v2200 = vmul.f32 %v2197, %v803
      %v2201 = vsub.f32 %v2186, %v2198
      %v2202 = vsub.f32 %v2187, %v2199
      %v2203 = vsub.f32 %v2188, %v2200
      %v2204 = vmul.f32 %v2201, %v2201
      %v2205 = vmul.f32 %v2202, %v2202
      %v2206 = vmul.f32 %v2203, %v2203
      %v2207 = vsel %vm793, %v2204, 0.0
      %2208 = vadd.xlane.f32.xlu0 %v2207
      %v2209 = vpop.xlane.xlu0 %2208
      %v2210 = vsel %vm793, %v2205, 0.0
      %2211 = vadd.xlane.f32.xlu0 %v2210
      %v2212 = vpop.xlane.xlu0 %2211
      %v2213 = vsel %vm793, %v2206, 0.0
      %2214 = vadd.xlane.f32.xlu0 %v2213
      %v2215 = vpop.xlane.xlu0 %2214
      %v2216 = vmul.f32 %v2209, %v803
      %v2217 = vmul.f32 %v2212, %v803
      %v2218 = vmul.f32 %v2215, %v803
      %v2219 = vadd.f32 %v2216, 1e-05
      %v2220 = vadd.f32 %v2217, 1e-05
      %v2221 = vadd.f32 %v2218, 1e-05
      %v2222 = vrsqrt.pop %v2219
      %v2223 = vrsqrt.pop %v2220
      %v2224 = vrsqrt.pop %v2221
      %v2225 = vmul.f32 %v2201, %v2222
      %v2226 = vmul.f32 %v2202, %v2223
      %v2227 = vmul.f32 %v2203, %v2224
      %v2228 = vld [vmem:[%s16] sm:$0x1]
      %v2230 = vlaneseq
      %v2231 = vshrl.u32 %v2230, 7
      %v2232 = vsub.s32 0, %v2231
      %v2233 = vrot.slane %v2228, %v2232
      %v2235 = vmul.f32 %v2225, %v2233
      %v2236 = vmul.f32 %v2226, %v2233
      %v2237 = vmul.f32 %v2227, %v2233
      %v2238 = vld [vmem:[%s17] sm:$0x1]
      %v2240 = vlaneseq
      %v2241 = vshrl.u32 %v2240, 7
      %v2242 = vsub.s32 0, %v2241
      %v2243 = vrot.slane %v2238, %v2242
      %v2245 = vadd.f32 %v2235, %v2243
      %v2246 = vadd.f32 %v2236, %v2243
      %v2247 = vadd.f32 %v2237, %v2243
      %v2248 = vld [vmem:[%s18] sm:$0x1]
      %2249 = vxpose.xlu0.b32.start [1/16] %v2245, 128
      %2250 = vxpose.xlu0.b32.cont [2/16] %v2246, 128
      %2251 = vxpose.xlu0.b32.cont [3/16] %v2247, 128
      %2252 = vxpose.xlu0.b32.cont [4/16] 0.0, 128
      %2253 = vxpose.xlu0.b32.cont [5/16] 0.0, 128
      %2254 = vxpose.xlu0.b32.cont [6/16] 0.0, 128
      %2255 = vxpose.xlu0.b32.cont [7/16] 0.0, 128
      %2256 = vxpose.xlu0.b32.cont [8/16] 0.0, 128
      %2257 = vxpose.xlu0.b32.cont [9/16] 0.0, 128
      %2258 = vxpose.xlu0.b32.cont [10/16] 0.0, 128
      %2259 = vxpose.xlu0.b32.cont [11/16] 0.0, 128
      %2260 = vxpose.xlu0.b32.cont [12/16] 0.0, 128
      %2261 = vxpose.xlu0.b32.cont [13/16] 0.0, 128
      %2262 = vxpose.xlu0.b32.cont [14/16] 0.0, 128
      %2263 = vxpose.xlu0.b32.cont [15/16] 0.0, 128
      %2264 = vxpose.xlu0.b32.end [16/16] 0.0, 128
      %v2265 = vpop.trf.xlu0
      %v2266 = vpop.trf.xlu0
      %v2267 = vpop.trf.xlu0
      %v2268 = vpop.trf.xlu0
      %v2269 = vpop.trf.xlu0
      %v2270 = vpop.trf.xlu0
      %v2271 = vpop.trf.xlu0
      %v2272 = vpop.trf.xlu0
      %v2273 = vpop.trf.xlu0
      %v2274 = vpop.trf.xlu0
      %v2275 = vpop.trf.xlu0
      %v2276 = vpop.trf.xlu0
      %v2277 = vpop.trf.xlu0
      %v2278 = vpop.trf.xlu0
      %v2279 = vpop.trf.xlu0
      %v2280 = vpop.trf.xlu0
      %v2281 = vpack.c.bf16 %v2266, %v2265
      %v2282 = vpack.c.bf16 %v2268, %v2267
      %v2284 = vsel %vm793, %v2248, 0
      %2286 = vmatprep.subr.bf16.mxu0 0
      %2287 = vmatpush1.bf16.msra.mxu0 0
      %2288 = vmatprep.subr.bf16.mxu0 0
      %2289 = vmatpush1.bf16.msra.mxu0 0
      %2290 = vmatprep.subr.bf16.mxu0 0
      %2291 = vmatpush1.bf16.msra.mxu0 0
      %2292 = vmatprep.subr.bf16.mxu0 0
      %2293 = vmatpush1.bf16.msra.mxu0 0
      %2294 = vmatprep.subr.bf16.mxu0 0
      %2295 = vmatpush1.bf16.msra.mxu0 0
      %2296 = vmatprep.subr.bf16.mxu0 0
      %2297 = vmatpush1.bf16.msra.mxu0 0
      %2298 = vmatprep.subr.bf16.mxu0 0
      %2299 = vmatpush1.bf16.msra.mxu0 %v2282
      %2300 = vmatprep.subr.bf16.mxu0 0
      %2301 = vmatpush1.bf16.msra.mxu0 %v2281
      %2302 = vmatprep.subr.bf16.mxu0 0
      %2303 = vmatpush2.bf16.msra.mxu0 0
      %2304 = vmatprep.subr.bf16.mxu0 0
      %2305 = vmatpush2.bf16.msra.mxu0 0
      %2306 = vmatprep.subr.bf16.mxu0 0
      %2307 = vmatpush2.bf16.msra.mxu0 0
      %2308 = vmatprep.subr.bf16.mxu0 0
      %2309 = vmatpush2.bf16.msra.mxu0 0
      %2310 = vmatprep.subr.bf16.mxu0 0
      %2311 = vmatpush2.bf16.msra.mxu0 0
      %2312 = vmatprep.subr.bf16.mxu0 0
      %2313 = vmatpush2.bf16.msra.mxu0 0
      %2314 = vmatprep.subr.bf16.mxu0 0
      %2315 = vmatpush2.bf16.msra.mxu0 0
      %2316 = vmatprep.subr.bf16.mxu0 0
      %2317 = vmatpush2.bf16.msra.mxu0 0
      %2318 = vmatprep.mubr.bf16.mxu0 0
      %2319 = vmatmul.mubr.bf16.gmra.mxu0 %v2284
      %v2320 = vpop.f32.mrf.mxu0
      %v2321 = vadd.f32 0.0, %v2320
      %v2322 = vpop.f32.mrf.mxu0
      %v2323 = vpop.f32.mrf.mxu0
      %v2324 = vpop.f32.mrf.mxu0
      %2325 = vdwg.mxu0
      %v2326 = vld [vmem:[%s20] sm:$0xff]
      %v2327 = vld [vmem:[%s20 + $0x8] sm:$0xff]
      %v2328 = vld [vmem:[%s20 + $0x10] sm:$0xff]
      %v2329 = vpack.c.bf16 %v2321, %v2321
      %v2330 = vld [vmem:[#allocation2] sm:$0x1]
      %2332 = vset.pattern.permute.xlu0 0
      %2333 = vperm.xlu0 %2332, %v2330
      %v2334 = vpop.permute.xlu0 %2333
      %v2336 = vlaneseq
      %v2337 = vshrl.u32 %v2336, 7
      %v2338 = vsub.s32 0, %v2337
      %v2339 = vrot.slane %v2334, %v2338
      %v2343 = vunpack.c.l.b16 %v2326
      %v2344 = vunpack.c.h.b16 %v2326
      %v2345 = vunpack.c.l.b16 %v2327
      %v2346 = vunpack.c.h.b16 %v2327
      %v2347 = vunpack.c.l.b16 %v2328
      %v2348 = vunpack.c.h.b16 %v2328
      %v2349 = vpack.c.b16 %v2345, %v2343
      %v2350 = vpack.c.b16 %v2346, %v2344
      %v2351 = vpack.c.b16 %v2347, %v2347
      %v2352 = vpack.c.b16 %v2348, %v2348
      %v2356 = vsel %vm1048, %v2329, 0
      %v2359 = vsel %vm990, %v2351, 0
      %v2362 = vsel %vm990, %v2352, 0
      %2364 = vmatprep.subr.bf16.mxu0 0
      %2365 = vmatpush1.bf16.msra.mxu0 0
      %2366 = vmatprep.subr.bf16.mxu0 0
      %2367 = vmatpush1.bf16.msra.mxu0 0
      %2368 = vmatprep.subr.bf16.mxu0 0
      %2369 = vmatpush1.bf16.msra.mxu0 0
      %2370 = vmatprep.subr.bf16.mxu0 0
      %2371 = vmatpush1.bf16.msra.mxu0 0
      %2372 = vmatprep.subr.bf16.mxu0 0
      %2373 = vmatpush1.bf16.msra.mxu0 0
      %2374 = vmatprep.subr.bf16.mxu0 0
      %2375 = vmatpush1.bf16.msra.mxu0 0
      %2376 = vmatprep.subr.bf16.mxu0 %v2362
      %2377 = vmatpush1.bf16.msra.mxu0 %v2359
      %2378 = vmatprep.subr.bf16.mxu0 %v2350
      %2379 = vmatpush1.bf16.msra.mxu0 %v2349
      %2380 = vmatprep.subr.bf16.mxu0 0
      %2381 = vmatpush2.bf16.msra.mxu0 0
      %2382 = vmatprep.subr.bf16.mxu0 0
      %2383 = vmatpush2.bf16.msra.mxu0 0
      %2384 = vmatprep.subr.bf16.mxu0 0
      %2385 = vmatpush2.bf16.msra.mxu0 0
      %2386 = vmatprep.subr.bf16.mxu0 0
      %2387 = vmatpush2.bf16.msra.mxu0 0
      %2388 = vmatprep.subr.bf16.mxu0 0
      %2389 = vmatpush2.bf16.msra.mxu0 0
      %2390 = vmatprep.subr.bf16.mxu0 0
      %2391 = vmatpush2.bf16.msra.mxu0 0
      %2392 = vmatprep.subr.bf16.mxu0 0
      %2393 = vmatpush2.bf16.msra.mxu0 0
      %2394 = vmatprep.subr.bf16.mxu0 0
      %2395 = vmatpush2.bf16.msra.mxu0 0
      %2396 = vmatprep.mubr.bf16.mxu0 0
      %2397 = vmatmul.mubr.bf16.gmra.mxu0 %v2356
      %v2398 = vpop.f32.mrf.mxu0
      %v2399 = vadd.f32 %v2339, %v2398
      %v2400 = vpop.f32.mrf.mxu0
      %v2401 = vadd.f32 %v2339, %v2400
      %v2402 = vpop.f32.mrf.mxu0
      %v2403 = vpop.f32.mrf.mxu0
      %2404 = vdwg.mxu0
      %v2407 = vcombine.low %v2399, %v2401
      %v2409 = vunpack.c.l.s4 1966171168
      %v2410 = vunpack.c.0.s8 %v2409
      %v2411 = vlaneseq
      %v2412 = vshrl.u32 %v2411, 7
      %v2413 = vsub.s32 %v2410, %v2412
      %v2414 = vrot.slane %v2407, %v2413
      %v2416 = vunpack.c.l.s4 1966171168
      %v2417 = vunpack.c.0.s8 %v2416
      %v2418 = vlaneseq
      %v2419 = vshrl.u32 %v2418, 7
      %v2420 = vsub.s32 %v2417, %v2419
      %v2421 = vrot.slane %v2414, %v2420
      %v2423 = vlaneseq
      %vm2424 = vcmp.ge.s32.totalorder %v2423, 0
      %vm2425 = vcmp.lt.s32.totalorder %v2423, 256
      %vm2426 = vmand %vm2424, %vm2425
      %2427 = vst.msk [vmem:[%s690] sm:$0x3] %vm2426, %v2421
      %v2428 = vsub.f32 0.0, %v2399
      %v2429 = vsub.f32 0.0, %v2401
      %v2430 = vmul.f32 %v2428, 1.442695
      %v2431 = vpow.pop %v2430
      %v2432 = vmul.f32 %v2429, 1.442695
      %v2433 = vpow.pop %v2432
      %v2434 = vadd.f32 %v2431, 1.0
      %v2435 = vadd.f32 %v2433, 1.0
      %v2436 = vrcp.pop %v2434
      %v2437 = vrcp.pop %v2435
      %v2438 = vmin.f32 %v2436, 1.0
      %v2439 = vmin.f32 %v2437, 1.0
      %v2442 = vcombine.low %v2438, %v2439
      %v2444 = vunpack.c.l.s4 1966171168
      %v2445 = vunpack.c.0.s8 %v2444
      %v2446 = vlaneseq
      %v2447 = vshrl.u32 %v2446, 7
      %v2448 = vsub.s32 %v2445, %v2447
      %v2449 = vrot.slane %v2442, %v2448
      %v2451 = vunpack.c.l.s4 1966171168
      %v2452 = vunpack.c.0.s8 %v2451
      %v2453 = vlaneseq
      %v2454 = vshrl.u32 %v2453, 7
      %v2455 = vsub.s32 %v2452, %v2454
      %v2456 = vrot.slane %v2449, %v2455
      %2458 = vst.msk [vmem:[%s694] sm:$0x3] %vm2426, %v2456
      %p2459 = scmp.lt.s32.totalorder %s36, 1
      %s2460 = scalar_select %p2459, %s36, 1
      %s2461 = smul.addr %s2460, 2
      %s2462 = scalar_lea.vmem %s21, %s2461
      %p2463 = scmp.lt.s32.totalorder %s36, 1
      %s2464 = scalar_select %p2463, %s36, 1
      %s2465 = smul.addr %s2464, 2
      %s2466 = scalar_lea.vmem %s22, %s2465
      // Predicated region
      $region105: #{segmenter_forward.1} parent=103 // pred_check
        %p2467 = pneg %p500
      $region106: #{segmenter_forward.1} parent=103 // pred_check_branch
        %2469 = sbr.rel (%p2467) target = $region108
      $region107: #{segmenter_forward.1} parent=103 // pred_region
        _
      $region108: #{segmenter_forward.1} parent=103 // pred_fallthru
        _
      // Predicated region
      $region109: #{segmenter_forward.1} parent=103 // pred_check
        %p2470 = pneg %p526
      $region110: #{segmenter_forward.1} parent=103 // pred_check_branch
        %2472 = sbr.rel (%p2470) target = $region112
      $region111: #{segmenter_forward.1} parent=103 // pred_region
        _
      $region112: #{segmenter_forward.1} parent=103 // pred_fallthru
        _
    $region104: #{segmenter_forward.1} parent=5 // pred_fallthru
      _
    %p2473 = scmp.le.s32.totalorder 2, %s31
    // Predicated region
    $region113: #{segmenter_forward.1} parent=5 // pred_check
      %p2474 = pneg %p2473
    $region114: #{segmenter_forward.1} parent=5 // pred_check_branch
      %2476 = sbr.rel (%p2474) target = $region116
    $region115: #{segmenter_forward.1} parent=5 // pred_region
      %s2477 = ssub.s32 %s31, 2
      // Predicated region
      $region117: #{segmenter_forward.1} parent=115 // pred_check
        %p2478 = pneg %p506
      $region118: #{segmenter_forward.1} parent=115 // pred_check_branch
        %2480 = sbr.rel (%p2478) target = $region120
      $region119: #{segmenter_forward.1} parent=115 // pred_region
        %p2481 = scmp.lt.s32.totalorder %s37, 1
        %s2482 = scalar_select %p2481, %s37, 1
        %s2483 = smul.addr %s2482, 2
        %s2484 = scalar_lea.vmem %s21, %s2483
      $region120: #{segmenter_forward.1} parent=115 // pred_fallthru
        _
      // Predicated region
      $region121: #{segmenter_forward.1} parent=115 // pred_check
        %p2485 = pneg %p532
      $region122: #{segmenter_forward.1} parent=115 // pred_check_branch
        %2487 = sbr.rel (%p2485) target = $region124
      $region123: #{segmenter_forward.1} parent=115 // pred_region
        %p2488 = scmp.lt.s32.totalorder %s37, 1
        %s2489 = scalar_select %p2488, %s37, 1
        %s2490 = smul.addr %s2489, 2
        %s2491 = scalar_lea.vmem %s22, %s2490
      $region124: #{segmenter_forward.1} parent=115 // pred_fallthru
        _
    $region116: #{segmenter_forward.1} parent=5 // pred_fallthru
      _
  $region6: #{segmenter_forward.1} parent=0 // loop_footer
    %s35 = sadd.s32 1, %s31
  $region7: #{segmenter_forward.1} parent=0 // loop_footer_branch
    %30 = sbr.rel target = $region3
  $region8: #{segmenter_forward.1} parent=0 // loop_exit
    _

</llo_original>
